<compile_context>
chip_gen: v5e
topology: v5e:2x2
jax: 0.10.0
libtpu: 0.0.40
codegen_flags: <defaults>
</compile_context>

<pallas_src>
import jax
import jax.numpy as jnp
from jax.experimental import pallas as pl
from jax.experimental.pallas import tpu as pltpu

LANES = 128                      # TPU lane width -> lane-dense outputs / padded feature dims
VMEM_LIMIT = 32 * 1024 * 1024    # safe on v5e/v6e (128 MiB) and v7x (64 MiB physical)
_TILE_CANDIDATES = (512, 384, 256, 128)


def _round_up(n, m):
    return (n + m - 1) // m * m


def _choose_tiling(n):
    """Pick (n_pad, tile): largest tile <= 512 whose padding adds <= one 128-block."""
    n128 = _round_up(max(n, 1), 128)
    for t in _TILE_CANDIDATES:
        if t <= n128 and _round_up(n128, t) - n128 <= 128:
            return _round_up(n128, t), t
    return n128, 128


def _tile_for(n_pad):
    """Largest candidate tile that divides n_pad (consistent with _choose_tiling)."""
    for t in _TILE_CANDIDATES:
        if n_pad % t == 0:
            return t
    return 128


# --------------------------------------------------------------------------
# kernel 1: XW1 = X @ W1   (feature transform, bf16 in, f32 accumulate)
# --------------------------------------------------------------------------
def _xw_kernel(x_ref, w_ref, o_ref):
    o_ref[...] = jnp.dot(
        x_ref[...], w_ref[...], preferred_element_type=jnp.float32
    ).astype(o_ref.dtype)


def _feature_transform(x_bf, w1_bf, *, tile):
    n_pad, f_pad = x_bf.shape
    h_pad = w1_bf.shape[1]
    return pl.pallas_call(
        _xw_kernel,
        out_shape=jax.ShapeDtypeStruct((n_pad, h_pad), jnp.bfloat16),
        grid_spec=pltpu.PrefetchScalarGridSpec(
            num_scalar_prefetch=0,
            grid=(n_pad // tile,),
            in_specs=[
                pl.BlockSpec((tile, f_pad), lambda i: (i, 0)),
                pl.BlockSpec((f_pad, h_pad), lambda i: (0, 0)),
            ],
            out_specs=pl.BlockSpec((tile, h_pad), lambda i: (i, 0)),
        ),
        compiler_params=pltpu.CompilerParams(
            dimension_semantics=("parallel",),
            vmem_limit_bytes=VMEM_LIMIT,
        ),
        cost_estimate=pl.CostEstimate(
            flops=2 * n_pad * f_pad * h_pad,
            transcendentals=0,
            bytes_accessed=2 * (n_pad * f_pad + f_pad * h_pad + n_pad * h_pad),
        ),
    )(x_bf, w1_bf)


# --------------------------------------------------------------------------
# kernel 2: H = relu(A @ XW1 + b1);  HW2 = sum(H * w2, lanes)  (fused tail)
#   output: [N_pad, LANES] f32, every lane holds HW2 (lane-dense store,
#   f32 hand-off to layer 2; the wrapper turns column 0 into a (1, N_pad) row)
# --------------------------------------------------------------------------
def _layer1_kernel(a_ref, xw_ref, b1_ref, w2_ref, o_ref, acc_ref):
    k = pl.program_id(1)

    @pl.when(k == 0)
    def _():
        acc_ref[...] = jnp.zeros_like(acc_ref)

    acc_ref[...] += jnp.dot(a_ref[...], xw_ref[...],
                            preferred_element_type=jnp.float32)

    @pl.when(k == pl.num_programs(1) - 1)
    def _():
        h = jnp.maximum(acc_ref[...] + b1_ref[...], 0.0)
        # F.dropout(x, training=self.training): eval mode -> identity.
        hw2 = jnp.sum(h * w2_ref[...], axis=-1, keepdims=True)   # VPU mul + XLU reduce
        o_ref[...] = jnp.broadcast_to(hw2, o_ref.shape).astype(o_ref.dtype)


def _layer1(a_bf, xw_bf, b1_pad, w2_row, *, tile):
    n_pad = a_bf.shape[0]
    h_pad = xw_bf.shape[1]
    kt = n_pad // tile
    return pl.pallas_call(
        _layer1_kernel,
        out_shape=jax.ShapeDtypeStruct((n_pad, LANES), jnp.float32),
        grid_spec=pltpu.PrefetchScalarGridSpec(
            num_scalar_prefetch=0,
            grid=(n_pad // tile, kt),
            in_specs=[
                pl.BlockSpec((tile, tile), lambda i, k: (i, k)),    # A_hat tile (bf16)
                pl.BlockSpec((tile, h_pad), lambda i, k: (k, 0)),   # XW1 tile  (bf16)
                pl.BlockSpec((1, h_pad), lambda i, k: (0, 0)),      # b1
                pl.BlockSpec((1, h_pad), lambda i, k: (0, 0)),      # w2 (row)
            ],
            out_specs=pl.BlockSpec((tile, LANES), lambda i, k: (i, 0)),
            scratch_shapes=[pltpu.VMEM((tile, h_pad), jnp.float32)],
        ),
        compiler_params=pltpu.CompilerParams(
            dimension_semantics=("parallel", "arbitrary"),
            vmem_limit_bytes=VMEM_LIMIT,
        ),
        cost_estimate=pl.CostEstimate(
            flops=2 * n_pad * n_pad * h_pad + 3 * n_pad * h_pad,
            transcendentals=0,
            bytes_accessed=2 * n_pad * n_pad
            + 2 * n_pad * h_pad * kt
            + 4 * n_pad * LANES,
        ),
    )(a_bf, xw_bf, b1_pad, w2_row)


# --------------------------------------------------------------------------
# kernel 3: OUT = A @ hw2 + b2   (VPU broadcast-multiply + lane reduce; no MXU,
#   no lane-replicated HW2 streaming; b2 as SMEM scalar; lane-dense output)
# --------------------------------------------------------------------------
def _layer2_kernel(a_ref, hw2_ref, b2_ref, o_ref, acc_ref):
    k = pl.program_id(1)

    @pl.when(k == 0)
    def _():
        acc_ref[...] = jnp.zeros_like(acc_ref)

    a = a_ref[...].astype(jnp.float32)                 # (tile, tile)
    w = hw2_ref[...]                                   # (1, tile) f32, lane = node idx
    acc_ref[...] += jnp.sum(a * w, axis=-1, keepdims=True)   # VPU mul + XLU reduce

    @pl.when(k == pl.num_programs(1) - 1)
    def _():
        o_ref[...] = jnp.broadcast_to(
            acc_ref[...] + b2_ref[0, 0], o_ref.shape
        ).astype(o_ref.dtype)


def _layer2(a_bf, hw2_row, b2_s, *, tile):
    n_pad = a_bf.shape[0]
    kt = n_pad // tile
    return pl.pallas_call(
        _layer2_kernel,
        out_shape=jax.ShapeDtypeStruct((n_pad, LANES), jnp.float32),
        grid_spec=pltpu.PrefetchScalarGridSpec(
            num_scalar_prefetch=0,
            grid=(n_pad // tile, kt),
            in_specs=[
                pl.BlockSpec((tile, tile), lambda i, k: (i, k)),    # A_hat tile (bf16)
                pl.BlockSpec((1, tile), lambda i, k: (0, k)),       # hw2 row (f32)
                pl.BlockSpec(memory_space=pltpu.MemorySpace.SMEM),  # b2 scalar
            ],
            out_specs=pl.BlockSpec((tile, LANES), lambda i, k: (i, 0)),
            scratch_shapes=[pltpu.VMEM((tile, 1), jnp.float32)],
        ),
        compiler_params=pltpu.CompilerParams(
            dimension_semantics=("parallel", "arbitrary"),
            vmem_limit_bytes=VMEM_LIMIT,
        ),
        cost_estimate=pl.CostEstimate(
            flops=2 * n_pad * n_pad,
            transcendentals=0,
            bytes_accessed=2 * n_pad * n_pad + 4 * n_pad * kt + 4 * n_pad * LANES,
        ),
    )(a_bf, hw2_row, b2_s)


# --------------------------------------------------------------------------
# glue: normalized adjacency (built once, padded, bf16), padding, forward
# --------------------------------------------------------------------------
def build_normalized_adjacency_bf16(edge_index, num_nodes, n_pad):
    """Padded bf16 A_hat = D^{-1/2} (A + I) D^{-1/2}, matching PyG gcn_norm.

    Self loops are only added where missing (add_remaining_self_loops).
    Duplicate edges are scatter-summed (matches PyG only for coalesced input).
    Built directly on the padded canvas; padded rows/cols stay zero."""
    src = edge_index[0].astype(jnp.int32)
    dst = edge_index[1].astype(jnp.int32)
    a = jnp.zeros((n_pad, n_pad), jnp.float32).at[dst, src].add(1.0)
    idx = jnp.arange(num_nodes, dtype=jnp.int32)
    missing = jnp.where(a[idx, idx] > 0, 0.0, 1.0)
    a = a.at[idx, idx].add(missing)
    deg = jnp.sum(a, axis=1)
    dinv = jnp.where(deg > 0, jax.lax.rsqrt(deg), 0.0)
    return (dinv[:, None] * a * dinv[None, :]).astype(jnp.bfloat16)


def prepare_graph(edge_index, num_nodes):
    """Precompute the padded bf16 A_hat once for a fixed graph."""
    n_pad, _ = _choose_tiling(num_nodes)
    return build_normalized_adjacency_bf16(edge_index, num_nodes, n_pad)


def init_params(key, f_in, hidden):
    k1, k2 = jax.random.split(key)
    lim1 = (6.0 / (f_in + hidden)) ** 0.5
    lim2 = (6.0 / (hidden + 1)) ** 0.5
    w1 = jax.random.uniform(k1, (f_in, hidden), jnp.float32, -lim1, lim1)
    w2 = jax.random.uniform(k2, (hidden, 1), jnp.float32, -lim2, lim2)
    b1 = jnp.zeros((1, hidden), jnp.float32)
    b2 = jnp.zeros((1, 1), jnp.float32)
    return w1, b1, w2, b2


def net_forward(x, a_bf, params):
    """Forward of Net in eval mode. a_bf: padded bf16 A_hat from prepare_graph."""
    w1, b1, w2, b2 = params
    n, f = x.shape
    h = w1.shape[1]

    n_pad = a_bf.shape[0]
    tile = _tile_for(n_pad)
    f_pad = _round_up(max(f, LANES), LANES)
    h_pad = _round_up(max(h, LANES), LANES)

    # zero padding is exact; bf16 operands, f32 MXU accumulation
    x_bf = jnp.zeros((n_pad, f_pad), jnp.bfloat16).at[:n, :f].set(
        x.astype(jnp.bfloat16))
    w1_bf = jnp.zeros((f_pad, h_pad), jnp.bfloat16).at[:f, :h].set(
        w1.astype(jnp.bfloat16))
    b1_pad = jnp.zeros((1, h_pad), jnp.float32).at[:, :h].set(b1)
    w2_row = jnp.zeros((1, h_pad), jnp.float32).at[:, :h].set(w2.T)
    b2_s = b2.reshape(1, 1).astype(jnp.float32)

    xw_bf = _feature_transform(x_bf, w1_bf, tile=tile)          # [N_pad, H_pad] bf16
    hw2_slab = _layer1(a_bf, xw_bf, b1_pad, w2_row, tile=tile)  # [N_pad, 128]  f32
    hw2_row = jnp.transpose(hw2_slab[:, :1])                    # (1, N_pad) f32 hand-off
    out_pad = _layer2(a_bf, hw2_row, b2_s, tile=tile)           # [N_pad, 128]  f32
    return out_pad[:n, :1]                                      # [N, 1]


if __name__ == "__main__":
    key = jax.random.PRNGKey(0)
    kx, kp = jax.random.split(key)

    num_nodes = 200          # pads to 256 -> single 256x256 A tile
    num_node_features = 8
    hidden_size = 32

    x = jax.random.normal(kx, (num_nodes, num_node_features), jnp.float32)

    # small undirected ring graph
    idx = jnp.arange(num_nodes, dtype=jnp.int32)
    nxt = (idx + 1) % num_nodes
    src = jnp.concatenate([idx, nxt])
    dst = jnp.concatenate([nxt, idx])
    edge_index = jnp.stack([src, dst], axis=0)   # [2, E]

    params = init_params(kp, num_node_features, hidden_size)

    # precompute padded bf16 A_hat once for the fixed graph, reuse across forwards
    a_bf = prepare_graph(edge_index, num_nodes)

    forward = jax.jit(net_forward)
    out = forward(x, a_bf, params)
    out = jax.block_until_ready(out)
    assert out.shape == (num_nodes, 1)

    # ---- reference checks (quiet) ----
    w1, b1, w2, b2 = params
    hi = jax.lax.Precision.HIGHEST

    # (a) mimic the kernel's numerics (bf16 matmul inputs, f32 accumulation,
    #     f32 HW2 hand-off)
    a32 = a_bf[:num_nodes, :num_nodes].astype(jnp.float32)
    xb = x.astype(jnp.bfloat16).astype(jnp.float32)
    w1b = w1.astype(jnp.bfloat16).astype(jnp.float32)
    xw = jnp.dot(xb, w1b, precision=hi).astype(jnp.bfloat16).astype(jnp.float32)
    h_ref = jnp.maximum(jnp.dot(a32, xw, precision=hi) + b1, 0.0)
    hw2 = jnp.sum(h_ref * w2.T, axis=-1, keepdims=True)
    ref_bf = jnp.dot(a32, hw2, precision=hi) + b2

    # (b) plain-f32 reference of the original module (eval mode)
    src32, dst32 = edge_index[0], edge_index[1]
    a_full = jnp.zeros((num_nodes, num_nodes), jnp.float32).at[dst32, src32].add(1.0)
    miss = jnp.where(jnp.diagonal(a_full) > 0, 0.0, 1.0)
    a_full = a_full + jnp.diag(miss)
    deg = jnp.sum(a_full, axis=1)
    dinv = jnp.where(deg > 0, jax.lax.rsqrt(deg), 0.0)
    a_hat = dinv[:, None] * a_full * dinv[None, :]
    h32 = jnp.maximum(
        jnp.dot(a_hat, jnp.dot(x, w1, precision=hi), precision=hi) + b1, 0.0)
    ref_f32 = jnp.dot(a_hat, jnp.dot(h32, w2, precision=hi), precision=hi) + b2

    assert jnp.allclose(out, ref_bf, atol=2e-2, rtol=2e-2), \
        float(jnp.max(jnp.abs(out - ref_bf)))
    assert jnp.allclose(out, ref_f32, atol=7e-2, rtol=7e-2), \
        float(jnp.max(jnp.abs(out - ref_f32)))

    print("KERNEL_OK")
</pallas_src>

<mosaic_0001>
module attributes {stable_mosaic.version = 11 : i64} {
  func.func @_layer1_kernel(%arg0: i32, %arg1: i32, %arg2: memref<256x256xbf16, #tpu.memory_space<vmem>>, %arg3: memref<256x128xbf16, #tpu.memory_space<vmem>>, %arg4: memref<1x128xf32, #tpu.memory_space<vmem>>, %arg5: memref<1x128xf32, #tpu.memory_space<vmem>>, %arg6: memref<256x128xf32, #tpu.memory_space<vmem>>, %arg7: memref<256x128xf32, #tpu.memory_space<vmem>>) attributes {dimension_semantics = [#tpu.dimension_semantics<parallel>, #tpu.dimension_semantics<arbitrary>], iteration_bounds = array<i64: 1, 1>, scalar_prefetch = 0 : i64, scratch_operands = 1 : i64, tpu.core_type = #tpu.core_type<tc>, window_params = [{transform_indices = @transform_0, window_bounds = array<i64: 256, 256>}, {transform_indices = @transform_1, window_bounds = array<i64: 256, 128>}, {pipeline_mode = #tpu.pipeline_mode<synchronous>, transform_indices = @transform_2, window_bounds = array<i64: 1, 128>}, {pipeline_mode = #tpu.pipeline_mode<synchronous>, transform_indices = @transform_3, window_bounds = array<i64: 1, 128>}, {transform_indices = @transform_4, window_bounds = array<i64: 256, 128>}]} {
    %c0_i32 = arith.constant 0 : i32
    %0 = arith.cmpi eq, %arg1, %c0_i32 : i32
    %1 = arith.extui %0 : i1 to i32
    %c0_i32_0 = arith.constant 0 : i32
    %2 = arith.cmpi ne, %1, %c0_i32_0 : i32
    scf.if %2 {
      %cst_10 = arith.constant 0.000000e+00 : f32
      %12 = vector.broadcast %cst_10 : f32 to vector<256x128xf32>
      %c0_11 = arith.constant 0 : index
      %c0_12 = arith.constant 0 : index
      %13 = vector.load %arg7[%c0_11, %c0_12] : memref<256x128xf32, #tpu.memory_space<vmem>>, vector<256x128xf32>
      tpu.vector_store %arg7[%c0_11, %c0_12], %12 {strides = array<i32>} : memref<256x128xf32, #tpu.memory_space<vmem>>, vector<256x128xf32>,
    } else {
    }
    %c0 = arith.constant 0 : index
    %c0_1 = arith.constant 0 : index
    %3 = vector.load %arg7[%c0, %c0_1] : memref<256x128xf32, #tpu.memory_space<vmem>>, vector<256x128xf32>
    %c0_2 = arith.constant 0 : index
    %c0_3 = arith.constant 0 : index
    %4 = vector.load %arg2[%c0_2, %c0_3] : memref<256x256xbf16, #tpu.memory_space<vmem>>, vector<256x256xbf16>
    %c0_4 = arith.constant 0 : index
    %c0_5 = arith.constant 0 : index
    %5 = vector.load %arg3[%c0_4, %c0_5] : memref<256x128xbf16, #tpu.memory_space<vmem>>, vector<256x128xbf16>
    %cst = arith.constant dense<0.000000e+00> : vector<256x128xf32>
    %6 = tpu.matmul %4, %5, %cst {dimension_numbers = #tpu.dot_dimension_numbers<[1], [0], [0], [1], [0, 0, 1, 1], [], []>} : vector<256x256xbf16>, vector<256x128xbf16>, vector<256x128xf32> -> vector<256x128xf32>
    %7 = arith.addf %3, %6 : vector<256x128xf32>
    %c0_6 = arith.constant 0 : index
    %c0_7 = arith.constant 0 : index
    %8 = vector.load %arg7[%c0_6, %c0_7] : memref<256x128xf32, #tpu.memory_space<vmem>>, vector<256x128xf32>
    tpu.vector_store %arg7[%c0_6, %c0_7], %7 {strides = array<i32>} : memref<256x128xf32, #tpu.memory_space<vmem>>, vector<256x128xf32>,
    %c0_i32_8 = arith.constant 0 : i32
    %9 = arith.cmpi eq, %arg1, %c0_i32_8 : i32
    %10 = arith.extui %9 : i1 to i32
    %c0_i32_9 = arith.constant 0 : i32
    %11 = arith.cmpi ne, %10, %c0_i32_9 : i32
    scf.if %11 {
      %c0_10 = arith.constant 0 : index
      %c0_11 = arith.constant 0 : index
      %12 = vector.load %arg7[%c0_10, %c0_11] : memref<256x128xf32, #tpu.memory_space<vmem>>, vector<256x128xf32>
      %c0_12 = arith.constant 0 : index
      %c0_13 = arith.constant 0 : index
      %13 = vector.load %arg4[%c0_12, %c0_13] : memref<1x128xf32, #tpu.memory_space<vmem>>, vector<1x128xf32>
      %14 = vector.broadcast %13 : vector<1x128xf32> to vector<256x128xf32>
      %15 = arith.addf %12, %14 : vector<256x128xf32>
      %cst_14 = arith.constant 0.000000e+00 : f32
      %16 = vector.broadcast %cst_14 : f32 to vector<256x128xf32>
      %17 = arith.maximumf %15, %16 : vector<256x128xf32>
      %c0_15 = arith.constant 0 : index
      %c0_16 = arith.constant 0 : index
      %18 = vector.load %arg5[%c0_15, %c0_16] : memref<1x128xf32, #tpu.memory_space<vmem>>, vector<1x128xf32>
      %19 = vector.broadcast %18 : vector<1x128xf32> to vector<256x128xf32>
      %20 = arith.mulf %17, %19 : vector<256x128xf32>
      %cst_17 = arith.constant dense<0.000000e+00> : vector<256xf32>
      %21 = vector.multi_reduction <add>, %20, %cst_17 [1] : vector<256x128xf32> to vector<256xf32>
      %22 = vector.shape_cast %21 : vector<256xf32> to vector<256x1xf32>
      %23 = vector.shape_cast %22 : vector<256x1xf32> to vector<256x1xf32>
      %24 = vector.broadcast %23 : vector<256x1xf32> to vector<256x128xf32>
      %c0_18 = arith.constant 0 : index
      %c0_19 = arith.constant 0 : index
      %25 = vector.load %arg6[%c0_18, %c0_19] : memref<256x128xf32, #tpu.memory_space<vmem>>, vector<256x128xf32>
      tpu.vector_store %arg6[%c0_18, %c0_19], %24 {strides = array<i32>} : memref<256x128xf32, #tpu.memory_space<vmem>>, vector<256x128xf32>,
    } else {
    }
    return
  }
  func.func @transform_0(%arg0: i32, %arg1: i32) -> (i32, i32) {
    %c0_i32 = arith.constant 0 : i32
    return %arg0, %arg1 : i32, i32
  }
  func.func @transform_1(%arg0: i32, %arg1: i32) -> (i32, i32) {
    %c0_i32 = arith.constant 0 : i32
    %c0_i32_0 = arith.constant 0 : i32
    return %arg1, %c0_i32 : i32, i32
  }
  func.func @transform_2(%arg0: i32, %arg1: i32) -> (i32, i32) {
    %c0_i32 = arith.constant 0 : i32
    %c0_i32_0 = arith.constant 0 : i32
    %c0_i32_1 = arith.constant 0 : i32
    return %c0_i32, %c0_i32_0 : i32, i32
  }
  func.func @transform_3(%arg0: i32, %arg1: i32) -> (i32, i32) {
    %c0_i32 = arith.constant 0 : i32
    %c0_i32_0 = arith.constant 0 : i32
    %c0_i32_1 = arith.constant 0 : i32
    return %c0_i32, %c0_i32_0 : i32, i32
  }
  func.func @transform_4(%arg0: i32, %arg1: i32) -> (i32, i32) {
    %c0_i32 = arith.constant 0 : i32
    %c0_i32_0 = arith.constant 0 : i32
    return %arg0, %c0_i32 : i32, i32
  }
}

module attributes {stable_mosaic.version = 11 : i64} {
  func.func @_xw_kernel(%arg0: i32, %arg1: memref<256x128xbf16, #tpu.memory_space<vmem>>, %arg2: memref<128x128xbf16, #tpu.memory_space<vmem>>, %arg3: memref<256x128xbf16, #tpu.memory_space<vmem>>) attributes {dimension_semantics = [#tpu.dimension_semantics<parallel>], iteration_bounds = array<i64: 1>, scalar_prefetch = 0 : i64, scratch_operands = 0 : i64, tpu.core_type = #tpu.core_type<tc>, window_params = [{transform_indices = @transform_0, window_bounds = array<i64: 256, 128>}, {pipeline_mode = #tpu.pipeline_mode<synchronous>, transform_indices = @transform_1, window_bounds = array<i64: 128, 128>}, {transform_indices = @transform_2, window_bounds = array<i64: 256, 128>}]} {
    %c0 = arith.constant 0 : index
    %c0_0 = arith.constant 0 : index
    %0 = vector.load %arg1[%c0, %c0_0] : memref<256x128xbf16, #tpu.memory_space<vmem>>, vector<256x128xbf16>
    %c0_1 = arith.constant 0 : index
    %c0_2 = arith.constant 0 : index
    %1 = vector.load %arg2[%c0_1, %c0_2] : memref<128x128xbf16, #tpu.memory_space<vmem>>, vector<128x128xbf16>
    %cst = arith.constant dense<0.000000e+00> : vector<256x128xf32>
    %2 = tpu.matmul %0, %1, %cst {dimension_numbers = #tpu.dot_dimension_numbers<[1], [0], [0], [1], [0, 0, 1, 1], [], []>} : vector<256x128xbf16>, vector<128x128xbf16>, vector<256x128xf32> -> vector<256x128xf32>
    %3 = arith.truncf %2 : vector<256x128xf32> to vector<256x128xbf16>
    %c0_3 = arith.constant 0 : index
    %c0_4 = arith.constant 0 : index
    %4 = vector.load %arg3[%c0_3, %c0_4] : memref<256x128xbf16, #tpu.memory_space<vmem>>, vector<256x128xbf16>
    tpu.vector_store %arg3[%c0_3, %c0_4], %3 {strides = array<i32>} : memref<256x128xbf16, #tpu.memory_space<vmem>>, vector<256x128xbf16>,
    return
  }
  func.func @transform_0(%arg0: i32) -> (i32, i32) {
    %c0_i32 = arith.constant 0 : i32
    %c0_i32_0 = arith.constant 0 : i32
    return %arg0, %c0_i32 : i32, i32
  }
  func.func @transform_1(%arg0: i32) -> (i32, i32) {
    %c0_i32 = arith.constant 0 : i32
    %c0_i32_0 = arith.constant 0 : i32
    %c0_i32_1 = arith.constant 0 : i32
    return %c0_i32, %c0_i32_0 : i32, i32
  }
  func.func @transform_2(%arg0: i32) -> (i32, i32) {
    %c0_i32 = arith.constant 0 : i32
    %c0_i32_0 = arith.constant 0 : i32
    return %arg0, %c0_i32 : i32, i32
  }
}

module attributes {stable_mosaic.version = 11 : i64} {
  func.func @_layer2_kernel(%arg0: i32, %arg1: i32, %arg2: memref<256x256xbf16, #tpu.memory_space<vmem>>, %arg3: memref<1x256xf32, #tpu.memory_space<vmem>>, %arg4: memref<1x1xf32, #tpu.memory_space<smem>>, %arg5: memref<256x128xf32, #tpu.memory_space<vmem>>, %arg6: memref<256x1xf32, #tpu.memory_space<vmem>>) attributes {dimension_semantics = [#tpu.dimension_semantics<parallel>, #tpu.dimension_semantics<arbitrary>], iteration_bounds = array<i64: 1, 1>, scalar_prefetch = 0 : i64, scratch_operands = 1 : i64, tpu.core_type = #tpu.core_type<tc>, window_params = [{transform_indices = @transform_0, window_bounds = array<i64: 256, 256>}, {transform_indices = @transform_1, window_bounds = array<i64: 1, 256>}, {transform_indices = @transform_2, window_bounds = array<i64: 1, 1>}, {transform_indices = @transform_3, window_bounds = array<i64: 256, 128>}]} {
    %c0_i32 = arith.constant 0 : i32
    %0 = arith.cmpi eq, %arg1, %c0_i32 : i32
    %1 = arith.extui %0 : i1 to i32
    %c0_i32_0 = arith.constant 0 : i32
    %2 = arith.cmpi ne, %1, %c0_i32_0 : i32
    scf.if %2 {
      %cst_10 = arith.constant 0.000000e+00 : f32
      %16 = vector.broadcast %cst_10 : f32 to vector<256x1xf32>
      %c0_11 = arith.constant 0 : index
      %c0_12 = arith.constant 0 : index
      %17 = vector.load %arg6[%c0_11, %c0_12] : memref<256x1xf32, #tpu.memory_space<vmem>>, vector<256x1xf32>
      tpu.vector_store %arg6[%c0_11, %c0_12], %16 {strides = array<i32>} : memref<256x1xf32, #tpu.memory_space<vmem>>, vector<256x1xf32>,
    } else {
    }
    %c0 = arith.constant 0 : index
    %c0_1 = arith.constant 0 : index
    %3 = vector.load %arg2[%c0, %c0_1] : memref<256x256xbf16, #tpu.memory_space<vmem>>, vector<256x256xbf16>
    %4 = arith.extf %3 : vector<256x256xbf16> to vector<256x256xf32>
    %c0_2 = arith.constant 0 : index
    %c0_3 = arith.constant 0 : index
    %5 = vector.load %arg3[%c0_2, %c0_3] : memref<1x256xf32, #tpu.memory_space<vmem>>, vector<1x256xf32>
    %c0_4 = arith.constant 0 : index
    %c0_5 = arith.constant 0 : index
    %6 = vector.load %arg6[%c0_4, %c0_5] : memref<256x1xf32, #tpu.memory_space<vmem>>, vector<256x1xf32>
    %7 = vector.broadcast %5 : vector<1x256xf32> to vector<256x256xf32>
    %8 = arith.mulf %4, %7 : vector<256x256xf32>
    %cst = arith.constant dense<0.000000e+00> : vector<256xf32>
    %9 = vector.multi_reduction <add>, %8, %cst [1] : vector<256x256xf32> to vector<256xf32>
    %10 = vector.shape_cast %9 : vector<256xf32> to vector<256x1xf32>
    %11 = arith.addf %6, %10 : vector<256x1xf32>
    %c0_6 = arith.constant 0 : index
    %c0_7 = arith.constant 0 : index
    %12 = vector.load %arg6[%c0_6, %c0_7] : memref<256x1xf32, #tpu.memory_space<vmem>>, vector<256x1xf32>
    tpu.vector_store %arg6[%c0_6, %c0_7], %11 {strides = array<i32>} : memref<256x1xf32, #tpu.memory_space<vmem>>, vector<256x1xf32>,
    %c0_i32_8 = arith.constant 0 : i32
    %13 = arith.cmpi eq, %arg1, %c0_i32_8 : i32
    %14 = arith.extui %13 : i1 to i32
    %c0_i32_9 = arith.constant 0 : i32
    %15 = arith.cmpi ne, %14, %c0_i32_9 : i32
    scf.if %15 {
      %c0_10 = arith.constant 0 : index
      %c0_11 = arith.constant 0 : index
      %16 = vector.load %arg6[%c0_10, %c0_11] : memref<256x1xf32, #tpu.memory_space<vmem>>, vector<256x1xf32>
      %c0_12 = arith.constant 0 : index
      %c0_13 = arith.constant 0 : index
      %17 = memref.load %arg4[%c0_12, %c0_13] : memref<1x1xf32, #tpu.memory_space<smem>>
      %18 = vector.broadcast %17 : f32 to vector<256x1xf32>
      %19 = arith.addf %16, %18 : vector<256x1xf32>
      %20 = vector.shape_cast %19 : vector<256x1xf32> to vector<256x1xf32>
      %21 = vector.broadcast %20 : vector<256x1xf32> to vector<256x128xf32>
      %c0_14 = arith.constant 0 : index
      %c0_15 = arith.constant 0 : index
      %22 = vector.load %arg5[%c0_14, %c0_15] : memref<256x128xf32, #tpu.memory_space<vmem>>, vector<256x128xf32>
      tpu.vector_store %arg5[%c0_14, %c0_15], %21 {strides = array<i32>} : memref<256x128xf32, #tpu.memory_space<vmem>>, vector<256x128xf32>,
    } else {
    }
    return
  }
  func.func @transform_0(%arg0: i32, %arg1: i32) -> (i32, i32) {
    %c0_i32 = arith.constant 0 : i32
    return %arg0, %arg1 : i32, i32
  }
  func.func @transform_1(%arg0: i32, %arg1: i32) -> (i32, i32) {
    %c0_i32 = arith.constant 0 : i32
    %c0_i32_0 = arith.constant 0 : i32
    return %c0_i32, %arg1 : i32, i32
  }
  func.func @transform_2(%arg0: i32, %arg1: i32) -> (i32, i32) {
    %c0_i32 = arith.constant 0 : i32
    %c0_i32_0 = arith.constant 0 : i32
    %c0_i32_1 = arith.constant 0 : i32
    return %c0_i32, %c0_i32_0 : i32, i32
  }
  func.func @transform_3(%arg0: i32, %arg1: i32) -> (i32, i32) {
    %c0_i32 = arith.constant 0 : i32
    %c0_i32_0 = arith.constant 0 : i32
    return %arg0, %c0_i32 : i32, i32
  }
}

</mosaic_0001>

<llo_original>
// kernel: net_forward.5
$region0: #{net_forward.5}
  #allocation0 [shape = 'u32[]', space=smem, size = 0x4, offset = 0x4, fixed_abs, tag = 'smem constant byte address 0x4 - core index']
  #allocation1 [shape = 'u32[72,128]{1,0:T(1,128)}', space=vmem, size = 0x9000, scoped, tag = 'internal scratch']
  #allocation2 [shape = 'f32[256,1]{1,0:T(8,128)}', space=vmem, size = 0x20000, scoped, tag = 'scratch operand']
  #allocation3 [shape = 'f32[1,1]{1,0:T(1,128)S(6)}', space=smem, size = 0x200, scoped, tag = 'scoped memory for net_forward.5']
  %s0 = inlined_call_operand.vmem [shape: bf16[256,256], index: 0, kind: input, shape index: {}]
  %s1 = inlined_call_operand.vmem [shape: f32[1,256], index: 1, kind: input, shape index: {}]
  %s2 = inlined_call_operand.<no memory space> [shape: f32[1,1], index: 2, kind: input, shape index: {}]
  %s3 = inlined_call_operand.vmem [shape: f32[256,128], index: 3, kind: output, shape index: {}]
  %s4 = sld [smem:[#allocation0]]
  $region30: #{net_forward.5} parent=0
    _
  %s6 = ssub.s32 1, %s4
  %s7 = scalar_select 0, %s6, %s4
  %8 = sst [smem:[#allocation3]] %s2
  // Predicated region
  $region2: #{net_forward.5} parent=0 // pred_check
    _
  $region3: #{net_forward.5} parent=0 // pred_check_branch
    %10 = sbr.rel (0) target = $region5
  $region4: #{net_forward.5} parent=0 // pred_region
    _
  $region5: #{net_forward.5} parent=0 // pred_fallthru
    _
  // Predicated region
  $region6: #{net_forward.5} parent=0 // pred_check
    _
  $region7: #{net_forward.5} parent=0 // pred_check_branch
    %12 = sbr.rel (0) target = $region9
  $region8: #{net_forward.5} parent=0 // pred_region
    _
  $region9: #{net_forward.5} parent=0 // pred_fallthru
    _
  // Predicated region
  $region10: #{net_forward.5} parent=0 // pred_check
    _
  $region11: #{net_forward.5} parent=0 // pred_check_branch
    %14 = sbr.rel (0) target = $region13
  $region12: #{net_forward.5} parent=0 // pred_region
    _
  $region13: #{net_forward.5} parent=0 // pred_fallthru
    _
  %p15 = scmp.eq.s32.totalorder 0, 0
  // Predicated region
  $region14: #{net_forward.5} parent=0 // pred_check
    %p16 = pneg %p15
  $region15: #{net_forward.5} parent=0 // pred_check_branch
    %18 = sbr.rel (%p16) target = $region17
  $region16: #{net_forward.5} parent=0 // pred_region
    %vm19 = vcmask 7168
    %20 = vst.msk [vmem:[#allocation2] sm:$0xff] %vm19, 0.0
    %21 = vst.msk [vmem:[#allocation2 + $0x8] sm:$0xff] %vm19, 0.0
    %22 = vst.msk [vmem:[#allocation2 + $0x10] sm:$0xff] %vm19, 0.0
    %23 = vst.msk [vmem:[#allocation2 + $0x18] sm:$0xff] %vm19, 0.0
    %24 = vst.msk [vmem:[#allocation2 + $0x20] sm:$0xff] %vm19, 0.0
    %25 = vst.msk [vmem:[#allocation2 + $0x28] sm:$0xff] %vm19, 0.0
    %26 = vst.msk [vmem:[#allocation2 + $0x30] sm:$0xff] %vm19, 0.0
    %27 = vst.msk [vmem:[#allocation2 + $0x38] sm:$0xff] %vm19, 0.0
    %28 = vst.msk [vmem:[#allocation2 + $0x40] sm:$0xff] %vm19, 0.0
    %29 = vst.msk [vmem:[#allocation2 + $0x48] sm:$0xff] %vm19, 0.0
    %30 = vst.msk [vmem:[#allocation2 + $0x50] sm:$0xff] %vm19, 0.0
    %31 = vst.msk [vmem:[#allocation2 + $0x58] sm:$0xff] %vm19, 0.0
    %32 = vst.msk [vmem:[#allocation2 + $0x60] sm:$0xff] %vm19, 0.0
    %33 = vst.msk [vmem:[#allocation2 + $0x68] sm:$0xff] %vm19, 0.0
    %34 = vst.msk [vmem:[#allocation2 + $0x70] sm:$0xff] %vm19, 0.0
    %35 = vst.msk [vmem:[#allocation2 + $0x78] sm:$0xff] %vm19, 0.0
    %36 = vst.msk [vmem:[#allocation2 + $0x80] sm:$0xff] %vm19, 0.0
    %37 = vst.msk [vmem:[#allocation2 + $0x88] sm:$0xff] %vm19, 0.0
    %38 = vst.msk [vmem:[#allocation2 + $0x90] sm:$0xff] %vm19, 0.0
    %39 = vst.msk [vmem:[#allocation2 + $0x98] sm:$0xff] %vm19, 0.0
    %40 = vst.msk [vmem:[#allocation2 + $0xa0] sm:$0xff] %vm19, 0.0
    %41 = vst.msk [vmem:[#allocation2 + $0xa8] sm:$0xff] %vm19, 0.0
    %42 = vst.msk [vmem:[#allocation2 + $0xb0] sm:$0xff] %vm19, 0.0
    %43 = vst.msk [vmem:[#allocation2 + $0xb8] sm:$0xff] %vm19, 0.0
    %44 = vst.msk [vmem:[#allocation2 + $0xc0] sm:$0xff] %vm19, 0.0
    %45 = vst.msk [vmem:[#allocation2 + $0xc8] sm:$0xff] %vm19, 0.0
    %46 = vst.msk [vmem:[#allocation2 + $0xd0] sm:$0xff] %vm19, 0.0
    %47 = vst.msk [vmem:[#allocation2 + $0xd8] sm:$0xff] %vm19, 0.0
    %48 = vst.msk [vmem:[#allocation2 + $0xe0] sm:$0xff] %vm19, 0.0
    %49 = vst.msk [vmem:[#allocation2 + $0xe8] sm:$0xff] %vm19, 0.0
    %50 = vst.msk [vmem:[#allocation2 + $0xf0] sm:$0xff] %vm19, 0.0
    %51 = vst.msk [vmem:[#allocation2 + $0xf8] sm:$0xff] %vm19, 0.0
  $region17: #{net_forward.5} parent=0 // pred_fallthru
    _
  %v52 = vld [vmem:[%s0] sm:$0xff]
  %v53 = vld [vmem:[%s0 + $0x8] sm:$0xff]
  %v54 = vld [vmem:[%s0 + $0x10] sm:$0xff]
  %v55 = vld [vmem:[%s0 + $0x18] sm:$0xff]
  %v56 = vld [vmem:[%s0 + $0x20] sm:$0xff]
  %v57 = vld [vmem:[%s0 + $0x28] sm:$0xff]
  %v58 = vld [vmem:[%s0 + $0x30] sm:$0xff]
  %v59 = vld [vmem:[%s0 + $0x38] sm:$0xff]
  %v60 = vld [vmem:[%s0 + $0x40] sm:$0xff]
  %v61 = vld [vmem:[%s0 + $0x48] sm:$0xff]
  %v62 = vld [vmem:[%s0 + $0x50] sm:$0xff]
  %v63 = vld [vmem:[%s0 + $0x58] sm:$0xff]
  %v64 = vld [vmem:[%s0 + $0x60] sm:$0xff]
  %v65 = vld [vmem:[%s0 + $0x68] sm:$0xff]
  %v66 = vld [vmem:[%s0 + $0x70] sm:$0xff]
  %v67 = vld [vmem:[%s0 + $0x78] sm:$0xff]
  %v68 = vld [vmem:[%s0 + $0x80] sm:$0xff]
  %v69 = vld [vmem:[%s0 + $0x88] sm:$0xff]
  %v70 = vld [vmem:[%s0 + $0x90] sm:$0xff]
  %v71 = vld [vmem:[%s0 + $0x98] sm:$0xff]
  %v72 = vld [vmem:[%s0 + $0xa0] sm:$0xff]
  %v73 = vld [vmem:[%s0 + $0xa8] sm:$0xff]
  %v74 = vld [vmem:[%s0 + $0xb0] sm:$0xff]
  %v75 = vld [vmem:[%s0 + $0xb8] sm:$0xff]
  %v76 = vld [vmem:[%s0 + $0xc0] sm:$0xff]
  %v77 = vld [vmem:[%s0 + $0xc8] sm:$0xff]
  %v78 = vld [vmem:[%s0 + $0xd0] sm:$0xff]
  %v79 = vld [vmem:[%s0 + $0xd8] sm:$0xff]
  %v80 = vld [vmem:[%s0 + $0xe0] sm:$0xff]
  %v81 = vld [vmem:[%s0 + $0xe8] sm:$0xff]
  %v82 = vld [vmem:[%s0 + $0xf0] sm:$0xff]
  %v83 = vld [vmem:[%s0 + $0xf8] sm:$0xff]
  %v84 = vunpack.c.l.bf16 %v52
  %v85 = vunpack.c.h.bf16 %v52
  %v86 = vunpack.c.l.bf16 %v53
  %v87 = vunpack.c.h.bf16 %v53
  %v88 = vunpack.c.l.bf16 %v54
  %v89 = vunpack.c.h.bf16 %v54
  %v90 = vunpack.c.l.bf16 %v55
  %v91 = vunpack.c.h.bf16 %v55
  %v92 = vunpack.c.l.bf16 %v56
  %v93 = vunpack.c.h.bf16 %v56
  %v94 = vunpack.c.l.bf16 %v57
  %v95 = vunpack.c.h.bf16 %v57
  %v96 = vunpack.c.l.bf16 %v58
  %v97 = vunpack.c.h.bf16 %v58
  %v98 = vunpack.c.l.bf16 %v59
  %v99 = vunpack.c.h.bf16 %v59
  %v100 = vunpack.c.l.bf16 %v60
  %v101 = vunpack.c.h.bf16 %v60
  %v102 = vunpack.c.l.bf16 %v61
  %v103 = vunpack.c.h.bf16 %v61
  %v104 = vunpack.c.l.bf16 %v62
  %v105 = vunpack.c.h.bf16 %v62
  %v106 = vunpack.c.l.bf16 %v63
  %v107 = vunpack.c.h.bf16 %v63
  %v108 = vunpack.c.l.bf16 %v64
  %v109 = vunpack.c.h.bf16 %v64
  %v110 = vunpack.c.l.bf16 %v65
  %v111 = vunpack.c.h.bf16 %v65
  %v112 = vunpack.c.l.bf16 %v66
  %v113 = vunpack.c.h.bf16 %v66
  %v114 = vunpack.c.l.bf16 %v67
  %v115 = vunpack.c.h.bf16 %v67
  %v116 = vunpack.c.l.bf16 %v68
  %v117 = vunpack.c.h.bf16 %v68
  %v118 = vunpack.c.l.bf16 %v69
  %v119 = vunpack.c.h.bf16 %v69
  %v120 = vunpack.c.l.bf16 %v70
  %v121 = vunpack.c.h.bf16 %v70
  %v122 = vunpack.c.l.bf16 %v71
  %v123 = vunpack.c.h.bf16 %v71
  %v124 = vunpack.c.l.bf16 %v72
  %v125 = vunpack.c.h.bf16 %v72
  %v126 = vunpack.c.l.bf16 %v73
  %v127 = vunpack.c.h.bf16 %v73
  %v128 = vunpack.c.l.bf16 %v74
  %v129 = vunpack.c.h.bf16 %v74
  %v130 = vunpack.c.l.bf16 %v75
  %v131 = vunpack.c.h.bf16 %v75
  %v132 = vunpack.c.l.bf16 %v76
  %v133 = vunpack.c.h.bf16 %v76
  %v134 = vunpack.c.l.bf16 %v77
  %v135 = vunpack.c.h.bf16 %v77
  %v136 = vunpack.c.l.bf16 %v78
  %v137 = vunpack.c.h.bf16 %v78
  %v138 = vunpack.c.l.bf16 %v79
  %v139 = vunpack.c.h.bf16 %v79
  %v140 = vunpack.c.l.bf16 %v80
  %v141 = vunpack.c.h.bf16 %v80
  %v142 = vunpack.c.l.bf16 %v81
  %v143 = vunpack.c.h.bf16 %v81
  %v144 = vunpack.c.l.bf16 %v82
  %v145 = vunpack.c.h.bf16 %v82
  %v146 = vunpack.c.l.bf16 %v83
  %v147 = vunpack.c.h.bf16 %v83
  %v148 = vld [vmem:[%s1] sm:$0x3]
  %v149 = vld [vmem:[#allocation2] sm:$0xff]
  %v150 = vld [vmem:[#allocation2 + $0x8] sm:$0xff]
  %v151 = vld [vmem:[#allocation2 + $0x10] sm:$0xff]
  %v152 = vld [vmem:[#allocation2 + $0x18] sm:$0xff]
  %v153 = vld [vmem:[#allocation2 + $0x20] sm:$0xff]
  %v154 = vld [vmem:[#allocation2 + $0x28] sm:$0xff]
  %v155 = vld [vmem:[#allocation2 + $0x30] sm:$0xff]
  %v156 = vld [vmem:[#allocation2 + $0x38] sm:$0xff]
  %v157 = vld [vmem:[#allocation2 + $0x40] sm:$0xff]
  %v158 = vld [vmem:[#allocation2 + $0x48] sm:$0xff]
  %v159 = vld [vmem:[#allocation2 + $0x50] sm:$0xff]
  %v160 = vld [vmem:[#allocation2 + $0x58] sm:$0xff]
  %v161 = vld [vmem:[#allocation2 + $0x60] sm:$0xff]
  %v162 = vld [vmem:[#allocation2 + $0x68] sm:$0xff]
  %v163 = vld [vmem:[#allocation2 + $0x70] sm:$0xff]
  %v164 = vld [vmem:[#allocation2 + $0x78] sm:$0xff]
  %v165 = vld [vmem:[#allocation2 + $0x80] sm:$0xff]
  %v166 = vld [vmem:[#allocation2 + $0x88] sm:$0xff]
  %v167 = vld [vmem:[#allocation2 + $0x90] sm:$0xff]
  %v168 = vld [vmem:[#allocation2 + $0x98] sm:$0xff]
  %v169 = vld [vmem:[#allocation2 + $0xa0] sm:$0xff]
  %v170 = vld [vmem:[#allocation2 + $0xa8] sm:$0xff]
  %v171 = vld [vmem:[#allocation2 + $0xb0] sm:$0xff]
  %v172 = vld [vmem:[#allocation2 + $0xb8] sm:$0xff]
  %v173 = vld [vmem:[#allocation2 + $0xc0] sm:$0xff]
  %v174 = vld [vmem:[#allocation2 + $0xc8] sm:$0xff]
  %v175 = vld [vmem:[#allocation2 + $0xd0] sm:$0xff]
  %v176 = vld [vmem:[#allocation2 + $0xd8] sm:$0xff]
  %v177 = vld [vmem:[#allocation2 + $0xe0] sm:$0xff]
  %v178 = vld [vmem:[#allocation2 + $0xe8] sm:$0xff]
  %v179 = vld [vmem:[#allocation2 + $0xf0] sm:$0xff]
  %v180 = vld [vmem:[#allocation2 + $0xf8] sm:$0xff]
  %v182 = vperm.slane %v148, 0
  %v183 = vperm.slane %v148, 1
  %v186 = vmul.f32 %v84, %v182
  %v187 = vmul.f32 %v85, %v183
  %v188 = vmul.f32 %v86, %v182
  %v189 = vmul.f32 %v87, %v183
  %v190 = vmul.f32 %v88, %v182
  %v191 = vmul.f32 %v89, %v183
  %v192 = vmul.f32 %v90, %v182
  %v193 = vmul.f32 %v91, %v183
  %v194 = vmul.f32 %v92, %v182
  %v195 = vmul.f32 %v93, %v183
  %v196 = vmul.f32 %v94, %v182
  %v197 = vmul.f32 %v95, %v183
  %v198 = vmul.f32 %v96, %v182
  %v199 = vmul.f32 %v97, %v183
  %v200 = vmul.f32 %v98, %v182
  %v201 = vmul.f32 %v99, %v183
  %v202 = vmul.f32 %v100, %v182
  %v203 = vmul.f32 %v101, %v183
  %v204 = vmul.f32 %v102, %v182
  %v205 = vmul.f32 %v103, %v183
  %v206 = vmul.f32 %v104, %v182
  %v207 = vmul.f32 %v105, %v183
  %v208 = vmul.f32 %v106, %v182
  %v209 = vmul.f32 %v107, %v183
  %v210 = vmul.f32 %v108, %v182
  %v211 = vmul.f32 %v109, %v183
  %v212 = vmul.f32 %v110, %v182
  %v213 = vmul.f32 %v111, %v183
  %v214 = vmul.f32 %v112, %v182
  %v215 = vmul.f32 %v113, %v183
  %v216 = vmul.f32 %v114, %v182
  %v217 = vmul.f32 %v115, %v183
  %v218 = vmul.f32 %v116, %v182
  %v219 = vmul.f32 %v117, %v183
  %v220 = vmul.f32 %v118, %v182
  %v221 = vmul.f32 %v119, %v183
  %v222 = vmul.f32 %v120, %v182
  %v223 = vmul.f32 %v121, %v183
  %v224 = vmul.f32 %v122, %v182
  %v225 = vmul.f32 %v123, %v183
  %v226 = vmul.f32 %v124, %v182
  %v227 = vmul.f32 %v125, %v183
  %v228 = vmul.f32 %v126, %v182
  %v229 = vmul.f32 %v127, %v183
  %v230 = vmul.f32 %v128, %v182
  %v231 = vmul.f32 %v129, %v183
  %v232 = vmul.f32 %v130, %v182
  %v233 = vmul.f32 %v131, %v183
  %v234 = vmul.f32 %v132, %v182
  %v235 = vmul.f32 %v133, %v183
  %v236 = vmul.f32 %v134, %v182
  %v237 = vmul.f32 %v135, %v183
  %v238 = vmul.f32 %v136, %v182
  %v239 = vmul.f32 %v137, %v183
  %v240 = vmul.f32 %v138, %v182
  %v241 = vmul.f32 %v139, %v183
  %v242 = vmul.f32 %v140, %v182
  %v243 = vmul.f32 %v141, %v183
  %v244 = vmul.f32 %v142, %v182
  %v245 = vmul.f32 %v143, %v183
  %v246 = vmul.f32 %v144, %v182
  %v247 = vmul.f32 %v145, %v183
  %v248 = vmul.f32 %v146, %v182
  %v249 = vmul.f32 %v147, %v183
  %v250 = vadd.f32 %v186, %v187
  %251 = vadd.xlane.f32.xlu0 %v250
  %v252 = vpop.xlane.xlu0 %251
  %v253 = vadd.f32 %v188, %v189
  %254 = vadd.xlane.f32.xlu0 %v253
  %v255 = vpop.xlane.xlu0 %254
  %v256 = vadd.f32 %v190, %v191
  %257 = vadd.xlane.f32.xlu0 %v256
  %v258 = vpop.xlane.xlu0 %257
  %v259 = vadd.f32 %v192, %v193
  %260 = vadd.xlane.f32.xlu0 %v259
  %v261 = vpop.xlane.xlu0 %260
  %v262 = vadd.f32 %v194, %v195
  %263 = vadd.xlane.f32.xlu0 %v262
  %v264 = vpop.xlane.xlu0 %263
  %v265 = vadd.f32 %v196, %v197
  %266 = vadd.xlane.f32.xlu0 %v265
  %v267 = vpop.xlane.xlu0 %266
  %v268 = vadd.f32 %v198, %v199
  %269 = vadd.xlane.f32.xlu0 %v268
  %v270 = vpop.xlane.xlu0 %269
  %v271 = vadd.f32 %v200, %v201
  %272 = vadd.xlane.f32.xlu0 %v271
  %v273 = vpop.xlane.xlu0 %272
  %v274 = vadd.f32 %v202, %v203
  %275 = vadd.xlane.f32.xlu0 %v274
  %v276 = vpop.xlane.xlu0 %275
  %v277 = vadd.f32 %v204, %v205
  %278 = vadd.xlane.f32.xlu0 %v277
  %v279 = vpop.xlane.xlu0 %278
  %v280 = vadd.f32 %v206, %v207
  %281 = vadd.xlane.f32.xlu0 %v280
  %v282 = vpop.xlane.xlu0 %281
  %v283 = vadd.f32 %v208, %v209
  %284 = vadd.xlane.f32.xlu0 %v283
  %v285 = vpop.xlane.xlu0 %284
  %v286 = vadd.f32 %v210, %v211
  %287 = vadd.xlane.f32.xlu0 %v286
  %v288 = vpop.xlane.xlu0 %287
  %v289 = vadd.f32 %v212, %v213
  %290 = vadd.xlane.f32.xlu0 %v289
  %v291 = vpop.xlane.xlu0 %290
  %v292 = vadd.f32 %v214, %v215
  %293 = vadd.xlane.f32.xlu0 %v292
  %v294 = vpop.xlane.xlu0 %293
  %v295 = vadd.f32 %v216, %v217
  %296 = vadd.xlane.f32.xlu0 %v295
  %v297 = vpop.xlane.xlu0 %296
  %v298 = vadd.f32 %v218, %v219
  %299 = vadd.xlane.f32.xlu0 %v298
  %v300 = vpop.xlane.xlu0 %299
  %v301 = vadd.f32 %v220, %v221
  %302 = vadd.xlane.f32.xlu0 %v301
  %v303 = vpop.xlane.xlu0 %302
  %v304 = vadd.f32 %v222, %v223
  %305 = vadd.xlane.f32.xlu0 %v304
  %v306 = vpop.xlane.xlu0 %305
  %v307 = vadd.f32 %v224, %v225
  %308 = vadd.xlane.f32.xlu0 %v307
  %v309 = vpop.xlane.xlu0 %308
  %v310 = vadd.f32 %v226, %v227
  %311 = vadd.xlane.f32.xlu0 %v310
  %v312 = vpop.xlane.xlu0 %311
  %v313 = vadd.f32 %v228, %v229
  %314 = vadd.xlane.f32.xlu0 %v313
  %v315 = vpop.xlane.xlu0 %314
  %v316 = vadd.f32 %v230, %v231
  %317 = vadd.xlane.f32.xlu0 %v316
  %v318 = vpop.xlane.xlu0 %317
  %v319 = vadd.f32 %v232, %v233
  %320 = vadd.xlane.f32.xlu0 %v319
  %v321 = vpop.xlane.xlu0 %320
  %v322 = vadd.f32 %v234, %v235
  %323 = vadd.xlane.f32.xlu0 %v322
  %v324 = vpop.xlane.xlu0 %323
  %v325 = vadd.f32 %v236, %v237
  %326 = vadd.xlane.f32.xlu0 %v325
  %v327 = vpop.xlane.xlu0 %326
  %v328 = vadd.f32 %v238, %v239
  %329 = vadd.xlane.f32.xlu0 %v328
  %v330 = vpop.xlane.xlu0 %329
  %v331 = vadd.f32 %v240, %v241
  %332 = vadd.xlane.f32.xlu0 %v331
  %v333 = vpop.xlane.xlu0 %332
  %v334 = vadd.f32 %v242, %v243
  %335 = vadd.xlane.f32.xlu0 %v334
  %v336 = vpop.xlane.xlu0 %335
  %v337 = vadd.f32 %v244, %v245
  %338 = vadd.xlane.f32.xlu0 %v337
  %v339 = vpop.xlane.xlu0 %338
  %v340 = vadd.f32 %v246, %v247
  %341 = vadd.xlane.f32.xlu0 %v340
  %v342 = vpop.xlane.xlu0 %341
  %v343 = vadd.f32 %v248, %v249
  %344 = vadd.xlane.f32.xlu0 %v343
  %v345 = vpop.xlane.xlu0 %344
  %v346 = vadd.f32 %v149, %v252
  %v347 = vadd.f32 %v150, %v255
  %v348 = vadd.f32 %v151, %v258
  %v349 = vadd.f32 %v152, %v261
  %v350 = vadd.f32 %v153, %v264
  %v351 = vadd.f32 %v154, %v267
  %v352 = vadd.f32 %v155, %v270
  %v353 = vadd.f32 %v156, %v273
  %v354 = vadd.f32 %v157, %v276
  %v355 = vadd.f32 %v158, %v279
  %v356 = vadd.f32 %v159, %v282
  %v357 = vadd.f32 %v160, %v285
  %v358 = vadd.f32 %v161, %v288
  %v359 = vadd.f32 %v162, %v291
  %v360 = vadd.f32 %v163, %v294
  %v361 = vadd.f32 %v164, %v297
  %v362 = vadd.f32 %v165, %v300
  %v363 = vadd.f32 %v166, %v303
  %v364 = vadd.f32 %v167, %v306
  %v365 = vadd.f32 %v168, %v309
  %v366 = vadd.f32 %v169, %v312
  %v367 = vadd.f32 %v170, %v315
  %v368 = vadd.f32 %v171, %v318
  %v369 = vadd.f32 %v172, %v321
  %v370 = vadd.f32 %v173, %v324
  %v371 = vadd.f32 %v174, %v327
  %v372 = vadd.f32 %v175, %v330
  %v373 = vadd.f32 %v176, %v333
  %v374 = vadd.f32 %v177, %v336
  %v375 = vadd.f32 %v178, %v339
  %v376 = vadd.f32 %v179, %v342
  %v377 = vadd.f32 %v180, %v345
  %vm378 = vcmask 7168
  %379 = vst.msk [vmem:[#allocation2] sm:$0xff] %vm378, %v346
  %380 = vst.msk [vmem:[#allocation2 + $0x8] sm:$0xff] %vm378, %v347
  %381 = vst.msk [vmem:[#allocation2 + $0x10] sm:$0xff] %vm378, %v348
  %382 = vst.msk [vmem:[#allocation2 + $0x18] sm:$0xff] %vm378, %v349
  %383 = vst.msk [vmem:[#allocation2 + $0x20] sm:$0xff] %vm378, %v350
  %384 = vst.msk [vmem:[#allocation2 + $0x28] sm:$0xff] %vm378, %v351
  %385 = vst.msk [vmem:[#allocation2 + $0x30] sm:$0xff] %vm378, %v352
  %386 = vst.msk [vmem:[#allocation2 + $0x38] sm:$0xff] %vm378, %v353
  %387 = vst.msk [vmem:[#allocation2 + $0x40] sm:$0xff] %vm378, %v354
  %388 = vst.msk [vmem:[#allocation2 + $0x48] sm:$0xff] %vm378, %v355
  %389 = vst.msk [vmem:[#allocation2 + $0x50] sm:$0xff] %vm378, %v356
  %390 = vst.msk [vmem:[#allocation2 + $0x58] sm:$0xff] %vm378, %v357
  %391 = vst.msk [vmem:[#allocation2 + $0x60] sm:$0xff] %vm378, %v358
  %392 = vst.msk [vmem:[#allocation2 + $0x68] sm:$0xff] %vm378, %v359
  %393 = vst.msk [vmem:[#allocation2 + $0x70] sm:$0xff] %vm378, %v360
  %394 = vst.msk [vmem:[#allocation2 + $0x78] sm:$0xff] %vm378, %v361
  %395 = vst.msk [vmem:[#allocation2 + $0x80] sm:$0xff] %vm378, %v362
  %396 = vst.msk [vmem:[#allocation2 + $0x88] sm:$0xff] %vm378, %v363
  %397 = vst.msk [vmem:[#allocation2 + $0x90] sm:$0xff] %vm378, %v364
  %398 = vst.msk [vmem:[#allocation2 + $0x98] sm:$0xff] %vm378, %v365
  %399 = vst.msk [vmem:[#allocation2 + $0xa0] sm:$0xff] %vm378, %v366
  %400 = vst.msk [vmem:[#allocation2 + $0xa8] sm:$0xff] %vm378, %v367
  %401 = vst.msk [vmem:[#allocation2 + $0xb0] sm:$0xff] %vm378, %v368
  %402 = vst.msk [vmem:[#allocation2 + $0xb8] sm:$0xff] %vm378, %v369
  %403 = vst.msk [vmem:[#allocation2 + $0xc0] sm:$0xff] %vm378, %v370
  %404 = vst.msk [vmem:[#allocation2 + $0xc8] sm:$0xff] %vm378, %v371
  %405 = vst.msk [vmem:[#allocation2 + $0xd0] sm:$0xff] %vm378, %v372
  %406 = vst.msk [vmem:[#allocation2 + $0xd8] sm:$0xff] %vm378, %v373
  %407 = vst.msk [vmem:[#allocation2 + $0xe0] sm:$0xff] %vm378, %v374
  %408 = vst.msk [vmem:[#allocation2 + $0xe8] sm:$0xff] %vm378, %v375
  %409 = vst.msk [vmem:[#allocation2 + $0xf0] sm:$0xff] %vm378, %v376
  %410 = vst.msk [vmem:[#allocation2 + $0xf8] sm:$0xff] %vm378, %v377
  // Predicated region
  $region18: #{net_forward.5} parent=0 // pred_check
    %p411 = pneg %p15
  $region19: #{net_forward.5} parent=0 // pred_check_branch
    %413 = sbr.rel (%p411) target = $region21
  $region20: #{net_forward.5} parent=0 // pred_region
    %v414 = vld [vmem:[#allocation2] sm:$0xff]
    %v415 = vld [vmem:[#allocation2 + $0x8] sm:$0xff]
    %v416 = vld [vmem:[#allocation2 + $0x10] sm:$0xff]
    %v417 = vld [vmem:[#allocation2 + $0x18] sm:$0xff]
    %v418 = vld [vmem:[#allocation2 + $0x20] sm:$0xff]
    %v419 = vld [vmem:[#allocation2 + $0x28] sm:$0xff]
    %v420 = vld [vmem:[#allocation2 + $0x30] sm:$0xff]
    %v421 = vld [vmem:[#allocation2 + $0x38] sm:$0xff]
    %v422 = vld [vmem:[#allocation2 + $0x40] sm:$0xff]
    %v423 = vld [vmem:[#allocation2 + $0x48] sm:$0xff]
    %v424 = vld [vmem:[#allocation2 + $0x50] sm:$0xff]
    %v425 = vld [vmem:[#allocation2 + $0x58] sm:$0xff]
    %v426 = vld [vmem:[#allocation2 + $0x60] sm:$0xff]
    %v427 = vld [vmem:[#allocation2 + $0x68] sm:$0xff]
    %v428 = vld [vmem:[#allocation2 + $0x70] sm:$0xff]
    %v429 = vld [vmem:[#allocation2 + $0x78] sm:$0xff]
    %v430 = vld [vmem:[#allocation2 + $0x80] sm:$0xff]
    %v431 = vld [vmem:[#allocation2 + $0x88] sm:$0xff]
    %v432 = vld [vmem:[#allocation2 + $0x90] sm:$0xff]
    %v433 = vld [vmem:[#allocation2 + $0x98] sm:$0xff]
    %v434 = vld [vmem:[#allocation2 + $0xa0] sm:$0xff]
    %v435 = vld [vmem:[#allocation2 + $0xa8] sm:$0xff]
    %v436 = vld [vmem:[#allocation2 + $0xb0] sm:$0xff]
    %v437 = vld [vmem:[#allocation2 + $0xb8] sm:$0xff]
    %v438 = vld [vmem:[#allocation2 + $0xc0] sm:$0xff]
    %v439 = vld [vmem:[#allocation2 + $0xc8] sm:$0xff]
    %v440 = vld [vmem:[#allocation2 + $0xd0] sm:$0xff]
    %v441 = vld [vmem:[#allocation2 + $0xd8] sm:$0xff]
    %v442 = vld [vmem:[#allocation2 + $0xe0] sm:$0xff]
    %v443 = vld [vmem:[#allocation2 + $0xe8] sm:$0xff]
    %v444 = vld [vmem:[#allocation2 + $0xf0] sm:$0xff]
    %v445 = vld [vmem:[#allocation2 + $0xf8] sm:$0xff]
    %s446 = sld [smem:[#allocation3]]
    %v447 = vstv %s446
    %v448 = vadd.f32 %v414, %v447
    %v449 = vadd.f32 %v415, %v447
    %v450 = vadd.f32 %v416, %v447
    %v451 = vadd.f32 %v417, %v447
    %v452 = vadd.f32 %v418, %v447
    %v453 = vadd.f32 %v419, %v447
    %v454 = vadd.f32 %v420, %v447
    %v455 = vadd.f32 %v421, %v447
    %v456 = vadd.f32 %v422, %v447
    %v457 = vadd.f32 %v423, %v447
    %v458 = vadd.f32 %v424, %v447
    %v459 = vadd.f32 %v425, %v447
    %v460 = vadd.f32 %v426, %v447
    %v461 = vadd.f32 %v427, %v447
    %v462 = vadd.f32 %v428, %v447
    %v463 = vadd.f32 %v429, %v447
    %v464 = vadd.f32 %v430, %v447
    %v465 = vadd.f32 %v431, %v447
    %v466 = vadd.f32 %v432, %v447
    %v467 = vadd.f32 %v433, %v447
    %v468 = vadd.f32 %v434, %v447
    %v469 = vadd.f32 %v435, %v447
    %v470 = vadd.f32 %v436, %v447
    %v471 = vadd.f32 %v437, %v447
    %v472 = vadd.f32 %v438, %v447
    %v473 = vadd.f32 %v439, %v447
    %v474 = vadd.f32 %v440, %v447
    %v475 = vadd.f32 %v441, %v447
    %v476 = vadd.f32 %v442, %v447
    %v477 = vadd.f32 %v443, %v447
    %v478 = vadd.f32 %v444, %v447
    %v479 = vadd.f32 %v445, %v447
    %481 = vset.pattern.permute.xlu0 0
    %482 = vperm.xlu0 %481, %v448
    %v483 = vpop.permute.xlu0 %482
    %486 = vset.pattern.permute.xlu0 0
    %487 = vperm.xlu0 %486, %v449
    %v488 = vpop.permute.xlu0 %487
    %491 = vset.pattern.permute.xlu0 0
    %492 = vperm.xlu0 %491, %v450
    %v493 = vpop.permute.xlu0 %492
    %496 = vset.pattern.permute.xlu0 0
    %497 = vperm.xlu0 %496, %v451
    %v498 = vpop.permute.xlu0 %497
    %501 = vset.pattern.permute.xlu0 0
    %502 = vperm.xlu0 %501, %v452
    %v503 = vpop.permute.xlu0 %502
    %506 = vset.pattern.permute.xlu0 0
    %507 = vperm.xlu0 %506, %v453
    %v508 = vpop.permute.xlu0 %507
    %511 = vset.pattern.permute.xlu0 0
    %512 = vperm.xlu0 %511, %v454
    %v513 = vpop.permute.xlu0 %512
    %516 = vset.pattern.permute.xlu0 0
    %517 = vperm.xlu0 %516, %v455
    %v518 = vpop.permute.xlu0 %517
    %521 = vset.pattern.permute.xlu0 0
    %522 = vperm.xlu0 %521, %v456
    %v523 = vpop.permute.xlu0 %522
    %526 = vset.pattern.permute.xlu0 0
    %527 = vperm.xlu0 %526, %v457
    %v528 = vpop.permute.xlu0 %527
    %531 = vset.pattern.permute.xlu0 0
    %532 = vperm.xlu0 %531, %v458
    %v533 = vpop.permute.xlu0 %532
    %536 = vset.pattern.permute.xlu0 0
    %537 = vperm.xlu0 %536, %v459
    %v538 = vpop.permute.xlu0 %537
    %541 = vset.pattern.permute.xlu0 0
    %542 = vperm.xlu0 %541, %v460
    %v543 = vpop.permute.xlu0 %542
    %546 = vset.pattern.permute.xlu0 0
    %547 = vperm.xlu0 %546, %v461
    %v548 = vpop.permute.xlu0 %547
    %551 = vset.pattern.permute.xlu0 0
    %552 = vperm.xlu0 %551, %v462
    %v553 = vpop.permute.xlu0 %552
    %556 = vset.pattern.permute.xlu0 0
    %557 = vperm.xlu0 %556, %v463
    %v558 = vpop.permute.xlu0 %557
    %561 = vset.pattern.permute.xlu0 0
    %562 = vperm.xlu0 %561, %v464
    %v563 = vpop.permute.xlu0 %562
    %566 = vset.pattern.permute.xlu0 0
    %567 = vperm.xlu0 %566, %v465
    %v568 = vpop.permute.xlu0 %567
    %571 = vset.pattern.permute.xlu0 0
    %572 = vperm.xlu0 %571, %v466
    %v573 = vpop.permute.xlu0 %572
    %576 = vset.pattern.permute.xlu0 0
    %577 = vperm.xlu0 %576, %v467
    %v578 = vpop.permute.xlu0 %577
    %581 = vset.pattern.permute.xlu0 0
    %582 = vperm.xlu0 %581, %v468
    %v583 = vpop.permute.xlu0 %582
    %586 = vset.pattern.permute.xlu0 0
    %587 = vperm.xlu0 %586, %v469
    %v588 = vpop.permute.xlu0 %587
    %591 = vset.pattern.permute.xlu0 0
    %592 = vperm.xlu0 %591, %v470
    %v593 = vpop.permute.xlu0 %592
    %596 = vset.pattern.permute.xlu0 0
    %597 = vperm.xlu0 %596, %v471
    %v598 = vpop.permute.xlu0 %597
    %601 = vset.pattern.permute.xlu0 0
    %602 = vperm.xlu0 %601, %v472
    %v603 = vpop.permute.xlu0 %602
    %606 = vset.pattern.permute.xlu0 0
    %607 = vperm.xlu0 %606, %v473
    %v608 = vpop.permute.xlu0 %607
    %611 = vset.pattern.permute.xlu0 0
    %612 = vperm.xlu0 %611, %v474
    %v613 = vpop.permute.xlu0 %612
    %616 = vset.pattern.permute.xlu0 0
    %617 = vperm.xlu0 %616, %v475
    %v618 = vpop.permute.xlu0 %617
    %621 = vset.pattern.permute.xlu0 0
    %622 = vperm.xlu0 %621, %v476
    %v623 = vpop.permute.xlu0 %622
    %626 = vset.pattern.permute.xlu0 0
    %627 = vperm.xlu0 %626, %v477
    %v628 = vpop.permute.xlu0 %627
    %631 = vset.pattern.permute.xlu0 0
    %632 = vperm.xlu0 %631, %v478
    %v633 = vpop.permute.xlu0 %632
    %636 = vset.pattern.permute.xlu0 0
    %637 = vperm.xlu0 %636, %v479
    %v638 = vpop.permute.xlu0 %637
    %640 = vst [vmem:[%s3] sm:$0xff] %v483
    %641 = vst [vmem:[%s3 + $0x8] sm:$0xff] %v488
    %642 = vst [vmem:[%s3 + $0x10] sm:$0xff] %v493
    %643 = vst [vmem:[%s3 + $0x18] sm:$0xff] %v498
    %644 = vst [vmem:[%s3 + $0x20] sm:$0xff] %v503
    %645 = vst [vmem:[%s3 + $0x28] sm:$0xff] %v508
    %646 = vst [vmem:[%s3 + $0x30] sm:$0xff] %v513
    %647 = vst [vmem:[%s3 + $0x38] sm:$0xff] %v518
    %648 = vst [vmem:[%s3 + $0x40] sm:$0xff] %v523
    %649 = vst [vmem:[%s3 + $0x48] sm:$0xff] %v528
    %650 = vst [vmem:[%s3 + $0x50] sm:$0xff] %v533
    %651 = vst [vmem:[%s3 + $0x58] sm:$0xff] %v538
    %652 = vst [vmem:[%s3 + $0x60] sm:$0xff] %v543
    %653 = vst [vmem:[%s3 + $0x68] sm:$0xff] %v548
    %654 = vst [vmem:[%s3 + $0x70] sm:$0xff] %v553
    %655 = vst [vmem:[%s3 + $0x78] sm:$0xff] %v558
    %656 = vst [vmem:[%s3 + $0x80] sm:$0xff] %v563
    %657 = vst [vmem:[%s3 + $0x88] sm:$0xff] %v568
    %658 = vst [vmem:[%s3 + $0x90] sm:$0xff] %v573
    %659 = vst [vmem:[%s3 + $0x98] sm:$0xff] %v578
    %660 = vst [vmem:[%s3 + $0xa0] sm:$0xff] %v583
    %661 = vst [vmem:[%s3 + $0xa8] sm:$0xff] %v588
    %662 = vst [vmem:[%s3 + $0xb0] sm:$0xff] %v593
    %663 = vst [vmem:[%s3 + $0xb8] sm:$0xff] %v598
    %664 = vst [vmem:[%s3 + $0xc0] sm:$0xff] %v603
    %665 = vst [vmem:[%s3 + $0xc8] sm:$0xff] %v608
    %666 = vst [vmem:[%s3 + $0xd0] sm:$0xff] %v613
    %667 = vst [vmem:[%s3 + $0xd8] sm:$0xff] %v618
    %668 = vst [vmem:[%s3 + $0xe0] sm:$0xff] %v623
    %669 = vst [vmem:[%s3 + $0xe8] sm:$0xff] %v628
    %670 = vst [vmem:[%s3 + $0xf0] sm:$0xff] %v633
    %671 = vst [vmem:[%s3 + $0xf8] sm:$0xff] %v638
  $region21: #{net_forward.5} parent=0 // pred_fallthru
    _
  // Predicated region
  $region22: #{net_forward.5} parent=0 // pred_check
    _
  $region23: #{net_forward.5} parent=0 // pred_check_branch
    %673 = sbr.rel (0) target = $region25
  $region24: #{net_forward.5} parent=0 // pred_region
    _
  $region25: #{net_forward.5} parent=0 // pred_fallthru
    _
  // Predicated region
  $region26: #{net_forward.5} parent=0 // pred_check
    _
  $region27: #{net_forward.5} parent=0 // pred_check_branch
    %675 = sbr.rel (0) target = $region29
  $region28: #{net_forward.5} parent=0 // pred_region
    _
  $region29: #{net_forward.5} parent=0 // pred_fallthru
    _

// kernel: net_forward.3
$region0: #{net_forward.3}
  #allocation0 [shape = 'u32[]', space=smem, size = 0x4, offset = 0x4, fixed_abs, tag = 'smem constant byte address 0x4 - core index']
  #allocation1 [shape = 'u32[72,128]{1,0:T(1,128)}', space=vmem, size = 0x9000, scoped, tag = 'internal scratch']
  %s0 = inlined_call_operand.vmem [shape: bf16[256,128], index: 0, kind: input, shape index: {}]
  %s1 = inlined_call_operand.vmem [shape: bf16[128,128], index: 1, kind: input, shape index: {}]
  %s2 = inlined_call_operand.vmem [shape: bf16[256,128], index: 2, kind: output, shape index: {}]
  %s3 = sld [smem:[#allocation0]]
  $region18: #{net_forward.3} parent=0
    _
  %s5 = ssub.s32 1, %s3
  %s6 = scalar_select 0, %s5, %s3
  // Predicated region
  $region2: #{net_forward.3} parent=0 // pred_check
    _
  $region3: #{net_forward.3} parent=0 // pred_check_branch
    %8 = sbr.rel (0) target = $region5
  $region4: #{net_forward.3} parent=0 // pred_region
    _
  $region5: #{net_forward.3} parent=0 // pred_fallthru
    _
  // Predicated region
  $region6: #{net_forward.3} parent=0 // pred_check
    _
  $region7: #{net_forward.3} parent=0 // pred_check_branch
    %10 = sbr.rel (0) target = $region9
  $region8: #{net_forward.3} parent=0 // pred_region
    _
  $region9: #{net_forward.3} parent=0 // pred_fallthru
    _
  %v11 = vld [vmem:[%s0] sm:$0xf]
  %v12 = vld [vmem:[%s0 + $0x4] sm:$0xf]
  %v13 = vld [vmem:[%s0 + $0x8] sm:$0xf]
  %v14 = vld [vmem:[%s0 + $0xc] sm:$0xf]
  %v15 = vld [vmem:[%s0 + $0x10] sm:$0xf]
  %v16 = vld [vmem:[%s0 + $0x14] sm:$0xf]
  %v17 = vld [vmem:[%s0 + $0x18] sm:$0xf]
  %v18 = vld [vmem:[%s0 + $0x1c] sm:$0xf]
  %v19 = vld [vmem:[%s0 + $0x20] sm:$0xf]
  %v20 = vld [vmem:[%s0 + $0x24] sm:$0xf]
  %v21 = vld [vmem:[%s0 + $0x28] sm:$0xf]
  %v22 = vld [vmem:[%s0 + $0x2c] sm:$0xf]
  %v23 = vld [vmem:[%s0 + $0x30] sm:$0xf]
  %v24 = vld [vmem:[%s0 + $0x34] sm:$0xf]
  %v25 = vld [vmem:[%s0 + $0x38] sm:$0xf]
  %v26 = vld [vmem:[%s0 + $0x3c] sm:$0xf]
  %v27 = vld [vmem:[%s0 + $0x40] sm:$0xf]
  %v28 = vld [vmem:[%s0 + $0x44] sm:$0xf]
  %v29 = vld [vmem:[%s0 + $0x48] sm:$0xf]
  %v30 = vld [vmem:[%s0 + $0x4c] sm:$0xf]
  %v31 = vld [vmem:[%s0 + $0x50] sm:$0xf]
  %v32 = vld [vmem:[%s0 + $0x54] sm:$0xf]
  %v33 = vld [vmem:[%s0 + $0x58] sm:$0xf]
  %v34 = vld [vmem:[%s0 + $0x5c] sm:$0xf]
  %v35 = vld [vmem:[%s0 + $0x60] sm:$0xf]
  %v36 = vld [vmem:[%s0 + $0x64] sm:$0xf]
  %v37 = vld [vmem:[%s0 + $0x68] sm:$0xf]
  %v38 = vld [vmem:[%s0 + $0x6c] sm:$0xf]
  %v39 = vld [vmem:[%s0 + $0x70] sm:$0xf]
  %v40 = vld [vmem:[%s0 + $0x74] sm:$0xf]
  %v41 = vld [vmem:[%s0 + $0x78] sm:$0xf]
  %v42 = vld [vmem:[%s0 + $0x7c] sm:$0xf]
  %v43 = vld [vmem:[%s1] sm:$0xf]
  %v44 = vld [vmem:[%s1 + $0x4] sm:$0xf]
  %v45 = vld [vmem:[%s1 + $0x8] sm:$0xf]
  %v46 = vld [vmem:[%s1 + $0xc] sm:$0xf]
  %v47 = vld [vmem:[%s1 + $0x10] sm:$0xf]
  %v48 = vld [vmem:[%s1 + $0x14] sm:$0xf]
  %v49 = vld [vmem:[%s1 + $0x18] sm:$0xf]
  %v50 = vld [vmem:[%s1 + $0x1c] sm:$0xf]
  %v51 = vld [vmem:[%s1 + $0x20] sm:$0xf]
  %v52 = vld [vmem:[%s1 + $0x24] sm:$0xf]
  %v53 = vld [vmem:[%s1 + $0x28] sm:$0xf]
  %v54 = vld [vmem:[%s1 + $0x2c] sm:$0xf]
  %v55 = vld [vmem:[%s1 + $0x30] sm:$0xf]
  %v56 = vld [vmem:[%s1 + $0x34] sm:$0xf]
  %v57 = vld [vmem:[%s1 + $0x38] sm:$0xf]
  %v58 = vld [vmem:[%s1 + $0x3c] sm:$0xf]
  %v91 = vunpack.c.l.b16 %v11
  %v92 = vunpack.c.l.b16 %v12
  %v93 = vunpack.c.l.b16 %v13
  %v94 = vunpack.c.l.b16 %v14
  %v95 = vunpack.c.l.b16 %v15
  %v96 = vunpack.c.l.b16 %v16
  %v97 = vunpack.c.l.b16 %v17
  %v98 = vunpack.c.l.b16 %v18
  %v99 = vunpack.c.l.b16 %v19
  %v100 = vunpack.c.l.b16 %v20
  %v101 = vunpack.c.l.b16 %v21
  %v102 = vunpack.c.l.b16 %v22
  %v103 = vunpack.c.l.b16 %v23
  %v104 = vunpack.c.l.b16 %v24
  %v105 = vunpack.c.l.b16 %v25
  %v106 = vunpack.c.l.b16 %v26
  %v107 = vunpack.c.l.b16 %v27
  %v108 = vunpack.c.l.b16 %v28
  %v109 = vunpack.c.l.b16 %v29
  %v110 = vunpack.c.l.b16 %v30
  %v111 = vunpack.c.l.b16 %v31
  %v112 = vunpack.c.l.b16 %v32
  %v113 = vunpack.c.l.b16 %v33
  %v114 = vunpack.c.l.b16 %v34
  %v115 = vunpack.c.l.b16 %v35
  %v116 = vunpack.c.l.b16 %v36
  %v117 = vunpack.c.l.b16 %v37
  %v118 = vunpack.c.l.b16 %v38
  %v119 = vunpack.c.l.b16 %v39
  %v120 = vunpack.c.l.b16 %v40
  %v121 = vunpack.c.l.b16 %v41
  %v122 = vunpack.c.l.b16 %v42
  %v123 = vpack.c.b16 %v92, %v91
  %v124 = vpack.c.b16 %v94, %v93
  %v125 = vpack.c.b16 %v96, %v95
  %v126 = vpack.c.b16 %v98, %v97
  %v127 = vpack.c.b16 %v100, %v99
  %v128 = vpack.c.b16 %v102, %v101
  %v129 = vpack.c.b16 %v104, %v103
  %v130 = vpack.c.b16 %v106, %v105
  %v131 = vpack.c.b16 %v108, %v107
  %v132 = vpack.c.b16 %v110, %v109
  %v133 = vpack.c.b16 %v112, %v111
  %v134 = vpack.c.b16 %v114, %v113
  %v135 = vpack.c.b16 %v116, %v115
  %v136 = vpack.c.b16 %v118, %v117
  %v137 = vpack.c.b16 %v120, %v119
  %v138 = vpack.c.b16 %v122, %v121
  %v171 = vunpack.c.l.b16 %v43
  %v172 = vunpack.c.l.b16 %v44
  %v173 = vunpack.c.l.b16 %v45
  %v174 = vunpack.c.l.b16 %v46
  %v175 = vunpack.c.l.b16 %v47
  %v176 = vunpack.c.l.b16 %v48
  %v177 = vunpack.c.l.b16 %v49
  %v178 = vunpack.c.l.b16 %v50
  %v179 = vunpack.c.l.b16 %v51
  %v180 = vunpack.c.l.b16 %v52
  %v181 = vunpack.c.l.b16 %v53
  %v182 = vunpack.c.l.b16 %v54
  %v183 = vunpack.c.l.b16 %v55
  %v184 = vunpack.c.l.b16 %v56
  %v185 = vunpack.c.l.b16 %v57
  %v186 = vunpack.c.l.b16 %v58
  %v187 = vpack.c.b16 %v172, %v171
  %v188 = vpack.c.b16 %v174, %v173
  %v189 = vpack.c.b16 %v176, %v175
  %v190 = vpack.c.b16 %v178, %v177
  %v191 = vpack.c.b16 %v180, %v179
  %v192 = vpack.c.b16 %v182, %v181
  %v193 = vpack.c.b16 %v184, %v183
  %v194 = vpack.c.b16 %v186, %v185
  %203 = vmatpush.bf16.msra.mxu0 %v194
  %204 = vmatpush.bf16.msra.mxu0 %v193
  %205 = vmatpush.bf16.msra.mxu0 %v192
  %206 = vmatpush.bf16.msra.mxu0 %v191
  %207 = vmatpush.bf16.msra.mxu0 %v190
  %208 = vmatpush.bf16.msra.mxu0 %v189
  %209 = vmatpush.bf16.msra.mxu0 %v188
  %210 = vmatpush.bf16.msra.mxu0 %v187
  %211 = vmatmul.bf16.gmra.mxu0 %v123
  %v212 = vpop.f32.mrf.mxu0
  %v213 = vadd.f32 0.0, %v212
  %v214 = vpop.f32.mrf.mxu0
  %v215 = vadd.f32 0.0, %v214
  %216 = vmatmul.bf16.gmra.mxu0 %v124
  %v217 = vpop.f32.mrf.mxu0
  %v218 = vadd.f32 0.0, %v217
  %v219 = vpop.f32.mrf.mxu0
  %v220 = vadd.f32 0.0, %v219
  %221 = vmatmul.bf16.gmra.mxu0 %v125
  %v222 = vpop.f32.mrf.mxu0
  %v223 = vadd.f32 0.0, %v222
  %v224 = vpop.f32.mrf.mxu0
  %v225 = vadd.f32 0.0, %v224
  %226 = vmatmul.bf16.gmra.mxu0 %v126
  %v227 = vpop.f32.mrf.mxu0
  %v228 = vadd.f32 0.0, %v227
  %v229 = vpop.f32.mrf.mxu0
  %v230 = vadd.f32 0.0, %v229
  %231 = vmatmul.bf16.gmra.mxu0 %v127
  %v232 = vpop.f32.mrf.mxu0
  %v233 = vadd.f32 0.0, %v232
  %v234 = vpop.f32.mrf.mxu0
  %v235 = vadd.f32 0.0, %v234
  %236 = vmatmul.bf16.gmra.mxu0 %v128
  %v237 = vpop.f32.mrf.mxu0
  %v238 = vadd.f32 0.0, %v237
  %v239 = vpop.f32.mrf.mxu0
  %v240 = vadd.f32 0.0, %v239
  %241 = vmatmul.bf16.gmra.mxu0 %v129
  %v242 = vpop.f32.mrf.mxu0
  %v243 = vadd.f32 0.0, %v242
  %v244 = vpop.f32.mrf.mxu0
  %v245 = vadd.f32 0.0, %v244
  %246 = vmatmul.bf16.gmra.mxu0 %v130
  %v247 = vpop.f32.mrf.mxu0
  %v248 = vadd.f32 0.0, %v247
  %v249 = vpop.f32.mrf.mxu0
  %v250 = vadd.f32 0.0, %v249
  %251 = vmatmul.bf16.gmra.mxu0 %v131
  %v252 = vpop.f32.mrf.mxu0
  %v253 = vadd.f32 0.0, %v252
  %v254 = vpop.f32.mrf.mxu0
  %v255 = vadd.f32 0.0, %v254
  %256 = vmatmul.bf16.gmra.mxu0 %v132
  %v257 = vpop.f32.mrf.mxu0
  %v258 = vadd.f32 0.0, %v257
  %v259 = vpop.f32.mrf.mxu0
  %v260 = vadd.f32 0.0, %v259
  %261 = vmatmul.bf16.gmra.mxu0 %v133
  %v262 = vpop.f32.mrf.mxu0
  %v263 = vadd.f32 0.0, %v262
  %v264 = vpop.f32.mrf.mxu0
  %v265 = vadd.f32 0.0, %v264
  %266 = vmatmul.bf16.gmra.mxu0 %v134
  %v267 = vpop.f32.mrf.mxu0
  %v268 = vadd.f32 0.0, %v267
  %v269 = vpop.f32.mrf.mxu0
  %v270 = vadd.f32 0.0, %v269
  %271 = vmatmul.bf16.gmra.mxu0 %v135
  %v272 = vpop.f32.mrf.mxu0
  %v273 = vadd.f32 0.0, %v272
  %v274 = vpop.f32.mrf.mxu0
  %v275 = vadd.f32 0.0, %v274
  %276 = vmatmul.bf16.gmra.mxu0 %v136
  %v277 = vpop.f32.mrf.mxu0
  %v278 = vadd.f32 0.0, %v277
  %v279 = vpop.f32.mrf.mxu0
  %v280 = vadd.f32 0.0, %v279
  %281 = vmatmul.bf16.gmra.mxu0 %v137
  %v282 = vpop.f32.mrf.mxu0
  %v283 = vadd.f32 0.0, %v282
  %v284 = vpop.f32.mrf.mxu0
  %v285 = vadd.f32 0.0, %v284
  %286 = vmatmul.bf16.gmra.mxu0 %v138
  %v287 = vpop.f32.mrf.mxu0
  %v288 = vadd.f32 0.0, %v287
  %v289 = vpop.f32.mrf.mxu0
  %v290 = vadd.f32 0.0, %v289
  %291 = vdwg.mxu0
  %v292 = vpack.c.bf16 %v213, %v213
  %v293 = vpack.c.bf16 %v215, %v215
  %v294 = vpack.c.bf16 %v218, %v218
  %v295 = vpack.c.bf16 %v220, %v220
  %v296 = vpack.c.bf16 %v223, %v223
  %v297 = vpack.c.bf16 %v225, %v225
  %v298 = vpack.c.bf16 %v228, %v228
  %v299 = vpack.c.bf16 %v230, %v230
  %v300 = vpack.c.bf16 %v233, %v233
  %v301 = vpack.c.bf16 %v235, %v235
  %v302 = vpack.c.bf16 %v238, %v238
  %v303 = vpack.c.bf16 %v240, %v240
  %v304 = vpack.c.bf16 %v243, %v243
  %v305 = vpack.c.bf16 %v245, %v245
  %v306 = vpack.c.bf16 %v248, %v248
  %v307 = vpack.c.bf16 %v250, %v250
  %v308 = vpack.c.bf16 %v253, %v253
  %v309 = vpack.c.bf16 %v255, %v255
  %v310 = vpack.c.bf16 %v258, %v258
  %v311 = vpack.c.bf16 %v260, %v260
  %v312 = vpack.c.bf16 %v263, %v263
  %v313 = vpack.c.bf16 %v265, %v265
  %v314 = vpack.c.bf16 %v268, %v268
  %v315 = vpack.c.bf16 %v270, %v270
  %v316 = vpack.c.bf16 %v273, %v273
  %v317 = vpack.c.bf16 %v275, %v275
  %v318 = vpack.c.bf16 %v278, %v278
  %v319 = vpack.c.bf16 %v280, %v280
  %v320 = vpack.c.bf16 %v283, %v283
  %v321 = vpack.c.bf16 %v285, %v285
  %v322 = vpack.c.bf16 %v288, %v288
  %v323 = vpack.c.bf16 %v290, %v290
  %324 = vst [vmem:[%s2] sm:$0xf] %v292
  %325 = vst [vmem:[%s2 + $0x4] sm:$0xf] %v293
  %326 = vst [vmem:[%s2 + $0x8] sm:$0xf] %v294
  %327 = vst [vmem:[%s2 + $0xc] sm:$0xf] %v295
  %328 = vst [vmem:[%s2 + $0x10] sm:$0xf] %v296
  %329 = vst [vmem:[%s2 + $0x14] sm:$0xf] %v297
  %330 = vst [vmem:[%s2 + $0x18] sm:$0xf] %v298
  %331 = vst [vmem:[%s2 + $0x1c] sm:$0xf] %v299
  %332 = vst [vmem:[%s2 + $0x20] sm:$0xf] %v300
  %333 = vst [vmem:[%s2 + $0x24] sm:$0xf] %v301
  %334 = vst [vmem:[%s2 + $0x28] sm:$0xf] %v302
  %335 = vst [vmem:[%s2 + $0x2c] sm:$0xf] %v303
  %336 = vst [vmem:[%s2 + $0x30] sm:$0xf] %v304
  %337 = vst [vmem:[%s2 + $0x34] sm:$0xf] %v305
  %338 = vst [vmem:[%s2 + $0x38] sm:$0xf] %v306
  %339 = vst [vmem:[%s2 + $0x3c] sm:$0xf] %v307
  %340 = vst [vmem:[%s2 + $0x40] sm:$0xf] %v308
  %341 = vst [vmem:[%s2 + $0x44] sm:$0xf] %v309
  %342 = vst [vmem:[%s2 + $0x48] sm:$0xf] %v310
  %343 = vst [vmem:[%s2 + $0x4c] sm:$0xf] %v311
  %344 = vst [vmem:[%s2 + $0x50] sm:$0xf] %v312
  %345 = vst [vmem:[%s2 + $0x54] sm:$0xf] %v313
  %346 = vst [vmem:[%s2 + $0x58] sm:$0xf] %v314
  %347 = vst [vmem:[%s2 + $0x5c] sm:$0xf] %v315
  %348 = vst [vmem:[%s2 + $0x60] sm:$0xf] %v316
  %349 = vst [vmem:[%s2 + $0x64] sm:$0xf] %v317
  %350 = vst [vmem:[%s2 + $0x68] sm:$0xf] %v318
  %351 = vst [vmem:[%s2 + $0x6c] sm:$0xf] %v319
  %352 = vst [vmem:[%s2 + $0x70] sm:$0xf] %v320
  %353 = vst [vmem:[%s2 + $0x74] sm:$0xf] %v321
  %354 = vst [vmem:[%s2 + $0x78] sm:$0xf] %v322
  %355 = vst [vmem:[%s2 + $0x7c] sm:$0xf] %v323
  // Predicated region
  $region10: #{net_forward.3} parent=0 // pred_check
    _
  $region11: #{net_forward.3} parent=0 // pred_check_branch
    %357 = sbr.rel (0) target = $region13
  $region12: #{net_forward.3} parent=0 // pred_region
    _
  $region13: #{net_forward.3} parent=0 // pred_fallthru
    _
  // Predicated region
  $region14: #{net_forward.3} parent=0 // pred_check
    _
  $region15: #{net_forward.3} parent=0 // pred_check_branch
    %359 = sbr.rel (0) target = $region17
  $region16: #{net_forward.3} parent=0 // pred_region
    _
  $region17: #{net_forward.3} parent=0 // pred_fallthru
    _

// kernel: net_forward.4
$region0: #{net_forward.4}
  #allocation0 [shape = 'u32[]', space=smem, size = 0x4, offset = 0x4, fixed_abs, tag = 'smem constant byte address 0x4 - core index']
  #allocation1 [shape = 'u32[72,128]{1,0:T(1,128)}', space=vmem, size = 0x9000, scoped, tag = 'internal scratch']
  #allocation2 [shape = 'f32[256,128]{1,0:T(8,128)}', space=vmem, size = 0x20000, scoped, tag = 'scratch operand']
  %s0 = inlined_call_operand.vmem [shape: bf16[256,256], index: 0, kind: input, shape index: {}]
  %s1 = inlined_call_operand.vmem [shape: bf16[256,128], index: 1, kind: input, shape index: {}]
  %s2 = inlined_call_operand.vmem [shape: f32[1,128], index: 2, kind: input, shape index: {}]
  %s3 = inlined_call_operand.vmem [shape: f32[1,128], index: 3, kind: input, shape index: {}]
  %s4 = inlined_call_operand.vmem [shape: f32[256,128], index: 4, kind: output, shape index: {}]
  %s5 = sld [smem:[#allocation0]]
  $region34: #{net_forward.4} parent=0
    _
  %s7 = ssub.s32 1, %s5
  %s8 = scalar_select 0, %s7, %s5
  // Predicated region
  $region2: #{net_forward.4} parent=0 // pred_check
    _
  $region3: #{net_forward.4} parent=0 // pred_check_branch
    %10 = sbr.rel (0) target = $region5
  $region4: #{net_forward.4} parent=0 // pred_region
    _
  $region5: #{net_forward.4} parent=0 // pred_fallthru
    _
  // Predicated region
  $region6: #{net_forward.4} parent=0 // pred_check
    _
  $region7: #{net_forward.4} parent=0 // pred_check_branch
    %12 = sbr.rel (0) target = $region9
  $region8: #{net_forward.4} parent=0 // pred_region
    _
  $region9: #{net_forward.4} parent=0 // pred_fallthru
    _
  // Predicated region
  $region10: #{net_forward.4} parent=0 // pred_check
    _
  $region11: #{net_forward.4} parent=0 // pred_check_branch
    %14 = sbr.rel (0) target = $region13
  $region12: #{net_forward.4} parent=0 // pred_region
    _
  $region13: #{net_forward.4} parent=0 // pred_fallthru
    _
  // Predicated region
  $region14: #{net_forward.4} parent=0 // pred_check
    _
  $region15: #{net_forward.4} parent=0 // pred_check_branch
    %16 = sbr.rel (0) target = $region17
  $region16: #{net_forward.4} parent=0 // pred_region
    _
  $region17: #{net_forward.4} parent=0 // pred_fallthru
    _
  %p17 = scmp.eq.s32.totalorder 0, 0
  // Predicated region
  $region18: #{net_forward.4} parent=0 // pred_check
    %p18 = pneg %p17
  $region19: #{net_forward.4} parent=0 // pred_check_branch
    %20 = sbr.rel (%p18) target = $region21
  $region20: #{net_forward.4} parent=0 // pred_region
    %21 = vst [vmem:[#allocation2] sm:$0xff] 0.0
    %22 = vst [vmem:[#allocation2 + $0x8] sm:$0xff] 0.0
    %23 = vst [vmem:[#allocation2 + $0x10] sm:$0xff] 0.0
    %24 = vst [vmem:[#allocation2 + $0x18] sm:$0xff] 0.0
    %25 = vst [vmem:[#allocation2 + $0x20] sm:$0xff] 0.0
    %26 = vst [vmem:[#allocation2 + $0x28] sm:$0xff] 0.0
    %27 = vst [vmem:[#allocation2 + $0x30] sm:$0xff] 0.0
    %28 = vst [vmem:[#allocation2 + $0x38] sm:$0xff] 0.0
    %29 = vst [vmem:[#allocation2 + $0x40] sm:$0xff] 0.0
    %30 = vst [vmem:[#allocation2 + $0x48] sm:$0xff] 0.0
    %31 = vst [vmem:[#allocation2 + $0x50] sm:$0xff] 0.0
    %32 = vst [vmem:[#allocation2 + $0x58] sm:$0xff] 0.0
    %33 = vst [vmem:[#allocation2 + $0x60] sm:$0xff] 0.0
    %34 = vst [vmem:[#allocation2 + $0x68] sm:$0xff] 0.0
    %35 = vst [vmem:[#allocation2 + $0x70] sm:$0xff] 0.0
    %36 = vst [vmem:[#allocation2 + $0x78] sm:$0xff] 0.0
    %37 = vst [vmem:[#allocation2 + $0x80] sm:$0xff] 0.0
    %38 = vst [vmem:[#allocation2 + $0x88] sm:$0xff] 0.0
    %39 = vst [vmem:[#allocation2 + $0x90] sm:$0xff] 0.0
    %40 = vst [vmem:[#allocation2 + $0x98] sm:$0xff] 0.0
    %41 = vst [vmem:[#allocation2 + $0xa0] sm:$0xff] 0.0
    %42 = vst [vmem:[#allocation2 + $0xa8] sm:$0xff] 0.0
    %43 = vst [vmem:[#allocation2 + $0xb0] sm:$0xff] 0.0
    %44 = vst [vmem:[#allocation2 + $0xb8] sm:$0xff] 0.0
    %45 = vst [vmem:[#allocation2 + $0xc0] sm:$0xff] 0.0
    %46 = vst [vmem:[#allocation2 + $0xc8] sm:$0xff] 0.0
    %47 = vst [vmem:[#allocation2 + $0xd0] sm:$0xff] 0.0
    %48 = vst [vmem:[#allocation2 + $0xd8] sm:$0xff] 0.0
    %49 = vst [vmem:[#allocation2 + $0xe0] sm:$0xff] 0.0
    %50 = vst [vmem:[#allocation2 + $0xe8] sm:$0xff] 0.0
    %51 = vst [vmem:[#allocation2 + $0xf0] sm:$0xff] 0.0
    %52 = vst [vmem:[#allocation2 + $0xf8] sm:$0xff] 0.0
  $region21: #{net_forward.4} parent=0 // pred_fallthru
    _
  %v53 = vld [vmem:[#allocation2] sm:$0xff]
  %v54 = vld [vmem:[#allocation2 + $0x8] sm:$0xff]
  %v55 = vld [vmem:[#allocation2 + $0x10] sm:$0xff]
  %v56 = vld [vmem:[#allocation2 + $0x18] sm:$0xff]
  %v57 = vld [vmem:[#allocation2 + $0x20] sm:$0xff]
  %v58 = vld [vmem:[#allocation2 + $0x28] sm:$0xff]
  %v59 = vld [vmem:[#allocation2 + $0x30] sm:$0xff]
  %v60 = vld [vmem:[#allocation2 + $0x38] sm:$0xff]
  %v61 = vld [vmem:[#allocation2 + $0x40] sm:$0xff]
  %v62 = vld [vmem:[#allocation2 + $0x48] sm:$0xff]
  %v63 = vld [vmem:[#allocation2 + $0x50] sm:$0xff]
  %v64 = vld [vmem:[#allocation2 + $0x58] sm:$0xff]
  %v65 = vld [vmem:[#allocation2 + $0x60] sm:$0xff]
  %v66 = vld [vmem:[#allocation2 + $0x68] sm:$0xff]
  %v67 = vld [vmem:[#allocation2 + $0x70] sm:$0xff]
  %v68 = vld [vmem:[#allocation2 + $0x78] sm:$0xff]
  %v69 = vld [vmem:[#allocation2 + $0x80] sm:$0xff]
  %v70 = vld [vmem:[#allocation2 + $0x88] sm:$0xff]
  %v71 = vld [vmem:[#allocation2 + $0x90] sm:$0xff]
  %v72 = vld [vmem:[#allocation2 + $0x98] sm:$0xff]
  %v73 = vld [vmem:[#allocation2 + $0xa0] sm:$0xff]
  %v74 = vld [vmem:[#allocation2 + $0xa8] sm:$0xff]
  %v75 = vld [vmem:[#allocation2 + $0xb0] sm:$0xff]
  %v76 = vld [vmem:[#allocation2 + $0xb8] sm:$0xff]
  %v77 = vld [vmem:[#allocation2 + $0xc0] sm:$0xff]
  %v78 = vld [vmem:[#allocation2 + $0xc8] sm:$0xff]
  %v79 = vld [vmem:[#allocation2 + $0xd0] sm:$0xff]
  %v80 = vld [vmem:[#allocation2 + $0xd8] sm:$0xff]
  %v81 = vld [vmem:[#allocation2 + $0xe0] sm:$0xff]
  %v82 = vld [vmem:[#allocation2 + $0xe8] sm:$0xff]
  %v83 = vld [vmem:[#allocation2 + $0xf0] sm:$0xff]
  %v84 = vld [vmem:[#allocation2 + $0xf8] sm:$0xff]
  %v85 = vld [vmem:[%s0] sm:$0xff]
  %v86 = vld [vmem:[%s0 + $0x8] sm:$0xff]
  %v87 = vld [vmem:[%s0 + $0x10] sm:$0xff]
  %v88 = vld [vmem:[%s0 + $0x18] sm:$0xff]
  %v89 = vld [vmem:[%s0 + $0x20] sm:$0xff]
  %v90 = vld [vmem:[%s0 + $0x28] sm:$0xff]
  %v91 = vld [vmem:[%s0 + $0x30] sm:$0xff]
  %v92 = vld [vmem:[%s0 + $0x38] sm:$0xff]
  %v93 = vld [vmem:[%s0 + $0x40] sm:$0xff]
  %v94 = vld [vmem:[%s0 + $0x48] sm:$0xff]
  %v95 = vld [vmem:[%s0 + $0x50] sm:$0xff]
  %v96 = vld [vmem:[%s0 + $0x58] sm:$0xff]
  %v97 = vld [vmem:[%s0 + $0x60] sm:$0xff]
  %v98 = vld [vmem:[%s0 + $0x68] sm:$0xff]
  %v99 = vld [vmem:[%s0 + $0x70] sm:$0xff]
  %v100 = vld [vmem:[%s0 + $0x78] sm:$0xff]
  %v101 = vld [vmem:[%s0 + $0x80] sm:$0xff]
  %v102 = vld [vmem:[%s0 + $0x88] sm:$0xff]
  %v103 = vld [vmem:[%s0 + $0x90] sm:$0xff]
  %v104 = vld [vmem:[%s0 + $0x98] sm:$0xff]
  %v105 = vld [vmem:[%s0 + $0xa0] sm:$0xff]
  %v106 = vld [vmem:[%s0 + $0xa8] sm:$0xff]
  %v107 = vld [vmem:[%s0 + $0xb0] sm:$0xff]
  %v108 = vld [vmem:[%s0 + $0xb8] sm:$0xff]
  %v109 = vld [vmem:[%s0 + $0xc0] sm:$0xff]
  %v110 = vld [vmem:[%s0 + $0xc8] sm:$0xff]
  %v111 = vld [vmem:[%s0 + $0xd0] sm:$0xff]
  %v112 = vld [vmem:[%s0 + $0xd8] sm:$0xff]
  %v113 = vld [vmem:[%s0 + $0xe0] sm:$0xff]
  %v114 = vld [vmem:[%s0 + $0xe8] sm:$0xff]
  %v115 = vld [vmem:[%s0 + $0xf0] sm:$0xff]
  %v116 = vld [vmem:[%s0 + $0xf8] sm:$0xff]
  %v117 = vld [vmem:[%s1] sm:$0xf]
  %v118 = vld [vmem:[%s1 + $0x4] sm:$0xf]
  %v119 = vld [vmem:[%s1 + $0x8] sm:$0xf]
  %v120 = vld [vmem:[%s1 + $0xc] sm:$0xf]
  %v121 = vld [vmem:[%s1 + $0x10] sm:$0xf]
  %v122 = vld [vmem:[%s1 + $0x14] sm:$0xf]
  %v123 = vld [vmem:[%s1 + $0x18] sm:$0xf]
  %v124 = vld [vmem:[%s1 + $0x1c] sm:$0xf]
  %v125 = vld [vmem:[%s1 + $0x20] sm:$0xf]
  %v126 = vld [vmem:[%s1 + $0x24] sm:$0xf]
  %v127 = vld [vmem:[%s1 + $0x28] sm:$0xf]
  %v128 = vld [vmem:[%s1 + $0x2c] sm:$0xf]
  %v129 = vld [vmem:[%s1 + $0x30] sm:$0xf]
  %v130 = vld [vmem:[%s1 + $0x34] sm:$0xf]
  %v131 = vld [vmem:[%s1 + $0x38] sm:$0xf]
  %v132 = vld [vmem:[%s1 + $0x3c] sm:$0xf]
  %v133 = vld [vmem:[%s1 + $0x40] sm:$0xf]
  %v134 = vld [vmem:[%s1 + $0x44] sm:$0xf]
  %v135 = vld [vmem:[%s1 + $0x48] sm:$0xf]
  %v136 = vld [vmem:[%s1 + $0x4c] sm:$0xf]
  %v137 = vld [vmem:[%s1 + $0x50] sm:$0xf]
  %v138 = vld [vmem:[%s1 + $0x54] sm:$0xf]
  %v139 = vld [vmem:[%s1 + $0x58] sm:$0xf]
  %v140 = vld [vmem:[%s1 + $0x5c] sm:$0xf]
  %v141 = vld [vmem:[%s1 + $0x60] sm:$0xf]
  %v142 = vld [vmem:[%s1 + $0x64] sm:$0xf]
  %v143 = vld [vmem:[%s1 + $0x68] sm:$0xf]
  %v144 = vld [vmem:[%s1 + $0x6c] sm:$0xf]
  %v145 = vld [vmem:[%s1 + $0x70] sm:$0xf]
  %v146 = vld [vmem:[%s1 + $0x74] sm:$0xf]
  %v147 = vld [vmem:[%s1 + $0x78] sm:$0xf]
  %v148 = vld [vmem:[%s1 + $0x7c] sm:$0xf]
  %v181 = vunpack.c.l.b16 %v85
  %v182 = vunpack.c.h.b16 %v85
  %v183 = vunpack.c.l.b16 %v86
  %v184 = vunpack.c.h.b16 %v86
  %v185 = vunpack.c.l.b16 %v87
  %v186 = vunpack.c.h.b16 %v87
  %v187 = vunpack.c.l.b16 %v88
  %v188 = vunpack.c.h.b16 %v88
  %v189 = vunpack.c.l.b16 %v89
  %v190 = vunpack.c.h.b16 %v89
  %v191 = vunpack.c.l.b16 %v90
  %v192 = vunpack.c.h.b16 %v90
  %v193 = vunpack.c.l.b16 %v91
  %v194 = vunpack.c.h.b16 %v91
  %v195 = vunpack.c.l.b16 %v92
  %v196 = vunpack.c.h.b16 %v92
  %v197 = vunpack.c.l.b16 %v93
  %v198 = vunpack.c.h.b16 %v93
  %v199 = vunpack.c.l.b16 %v94
  %v200 = vunpack.c.h.b16 %v94
  %v201 = vunpack.c.l.b16 %v95
  %v202 = vunpack.c.h.b16 %v95
  %v203 = vunpack.c.l.b16 %v96
  %v204 = vunpack.c.h.b16 %v96
  %v205 = vunpack.c.l.b16 %v97
  %v206 = vunpack.c.h.b16 %v97
  %v207 = vunpack.c.l.b16 %v98
  %v208 = vunpack.c.h.b16 %v98
  %v209 = vunpack.c.l.b16 %v99
  %v210 = vunpack.c.h.b16 %v99
  %v211 = vunpack.c.l.b16 %v100
  %v212 = vunpack.c.h.b16 %v100
  %v213 = vunpack.c.l.b16 %v101
  %v214 = vunpack.c.h.b16 %v101
  %v215 = vunpack.c.l.b16 %v102
  %v216 = vunpack.c.h.b16 %v102
  %v217 = vunpack.c.l.b16 %v103
  %v218 = vunpack.c.h.b16 %v103
  %v219 = vunpack.c.l.b16 %v104
  %v220 = vunpack.c.h.b16 %v104
  %v221 = vunpack.c.l.b16 %v105
  %v222 = vunpack.c.h.b16 %v105
  %v223 = vunpack.c.l.b16 %v106
  %v224 = vunpack.c.h.b16 %v106
  %v225 = vunpack.c.l.b16 %v107
  %v226 = vunpack.c.h.b16 %v107
  %v227 = vunpack.c.l.b16 %v108
  %v228 = vunpack.c.h.b16 %v108
  %v229 = vunpack.c.l.b16 %v109
  %v230 = vunpack.c.h.b16 %v109
  %v231 = vunpack.c.l.b16 %v110
  %v232 = vunpack.c.h.b16 %v110
  %v233 = vunpack.c.l.b16 %v111
  %v234 = vunpack.c.h.b16 %v111
  %v235 = vunpack.c.l.b16 %v112
  %v236 = vunpack.c.h.b16 %v112
  %v237 = vunpack.c.l.b16 %v113
  %v238 = vunpack.c.h.b16 %v113
  %v239 = vunpack.c.l.b16 %v114
  %v240 = vunpack.c.h.b16 %v114
  %v241 = vunpack.c.l.b16 %v115
  %v242 = vunpack.c.h.b16 %v115
  %v243 = vunpack.c.l.b16 %v116
  %v244 = vunpack.c.h.b16 %v116
  %v245 = vpack.c.b16 %v183, %v181
  %v246 = vpack.c.b16 %v184, %v182
  %v247 = vpack.c.b16 %v187, %v185
  %v248 = vpack.c.b16 %v188, %v186
  %v249 = vpack.c.b16 %v191, %v189
  %v250 = vpack.c.b16 %v192, %v190
  %v251 = vpack.c.b16 %v195, %v193
  %v252 = vpack.c.b16 %v196, %v194
  %v253 = vpack.c.b16 %v199, %v197
  %v254 = vpack.c.b16 %v200, %v198
  %v255 = vpack.c.b16 %v203, %v201
  %v256 = vpack.c.b16 %v204, %v202
  %v257 = vpack.c.b16 %v207, %v205
  %v258 = vpack.c.b16 %v208, %v206
  %v259 = vpack.c.b16 %v211, %v209
  %v260 = vpack.c.b16 %v212, %v210
  %v261 = vpack.c.b16 %v215, %v213
  %v262 = vpack.c.b16 %v216, %v214
  %v263 = vpack.c.b16 %v219, %v217
  %v264 = vpack.c.b16 %v220, %v218
  %v265 = vpack.c.b16 %v223, %v221
  %v266 = vpack.c.b16 %v224, %v222
  %v267 = vpack.c.b16 %v227, %v225
  %v268 = vpack.c.b16 %v228, %v226
  %v269 = vpack.c.b16 %v231, %v229
  %v270 = vpack.c.b16 %v232, %v230
  %v271 = vpack.c.b16 %v235, %v233
  %v272 = vpack.c.b16 %v236, %v234
  %v273 = vpack.c.b16 %v239, %v237
  %v274 = vpack.c.b16 %v240, %v238
  %v275 = vpack.c.b16 %v243, %v241
  %v276 = vpack.c.b16 %v244, %v242
  %v341 = vunpack.c.l.b16 %v117
  %v342 = vunpack.c.l.b16 %v118
  %v343 = vunpack.c.l.b16 %v119
  %v344 = vunpack.c.l.b16 %v120
  %v345 = vunpack.c.l.b16 %v121
  %v346 = vunpack.c.l.b16 %v122
  %v347 = vunpack.c.l.b16 %v123
  %v348 = vunpack.c.l.b16 %v124
  %v349 = vunpack.c.l.b16 %v125
  %v350 = vunpack.c.l.b16 %v126
  %v351 = vunpack.c.l.b16 %v127
  %v352 = vunpack.c.l.b16 %v128
  %v353 = vunpack.c.l.b16 %v129
  %v354 = vunpack.c.l.b16 %v130
  %v355 = vunpack.c.l.b16 %v131
  %v356 = vunpack.c.l.b16 %v132
  %v357 = vunpack.c.l.b16 %v133
  %v358 = vunpack.c.l.b16 %v134
  %v359 = vunpack.c.l.b16 %v135
  %v360 = vunpack.c.l.b16 %v136
  %v361 = vunpack.c.l.b16 %v137
  %v362 = vunpack.c.l.b16 %v138
  %v363 = vunpack.c.l.b16 %v139
  %v364 = vunpack.c.l.b16 %v140
  %v365 = vunpack.c.l.b16 %v141
  %v366 = vunpack.c.l.b16 %v142
  %v367 = vunpack.c.l.b16 %v143
  %v368 = vunpack.c.l.b16 %v144
  %v369 = vunpack.c.l.b16 %v145
  %v370 = vunpack.c.l.b16 %v146
  %v371 = vunpack.c.l.b16 %v147
  %v372 = vunpack.c.l.b16 %v148
  %v373 = vpack.c.b16 %v342, %v341
  %v374 = vpack.c.b16 %v344, %v343
  %v375 = vpack.c.b16 %v346, %v345
  %v376 = vpack.c.b16 %v348, %v347
  %v377 = vpack.c.b16 %v350, %v349
  %v378 = vpack.c.b16 %v352, %v351
  %v379 = vpack.c.b16 %v354, %v353
  %v380 = vpack.c.b16 %v356, %v355
  %v381 = vpack.c.b16 %v358, %v357
  %v382 = vpack.c.b16 %v360, %v359
  %v383 = vpack.c.b16 %v362, %v361
  %v384 = vpack.c.b16 %v364, %v363
  %v385 = vpack.c.b16 %v366, %v365
  %v386 = vpack.c.b16 %v368, %v367
  %v387 = vpack.c.b16 %v370, %v369
  %v388 = vpack.c.b16 %v372, %v371
  %405 = vmatpush.bf16.msra.mxu0 %v380
  %406 = vmatpush.bf16.msra.mxu0 %v379
  %407 = vmatpush.bf16.msra.mxu0 %v378
  %408 = vmatpush.bf16.msra.mxu0 %v377
  %409 = vmatpush.bf16.msra.mxu0 %v376
  %410 = vmatpush.bf16.msra.mxu0 %v375
  %411 = vmatpush.bf16.msra.mxu0 %v374
  %412 = vmatpush.bf16.msra.mxu0 %v373
  %413 = vmatmul.bf16.gmra.mxu0 %v245
  %v414 = vpop.f32.mrf.mxu0
  %v415 = vadd.f32 0.0, %v414
  %v416 = vpop.f32.mrf.mxu0
  %v417 = vadd.f32 0.0, %v416
  %418 = vmatmul.bf16.gmra.mxu0 %v247
  %v419 = vpop.f32.mrf.mxu0
  %v420 = vadd.f32 0.0, %v419
  %v421 = vpop.f32.mrf.mxu0
  %v422 = vadd.f32 0.0, %v421
  %423 = vmatmul.bf16.gmra.mxu0 %v249
  %v424 = vpop.f32.mrf.mxu0
  %v425 = vadd.f32 0.0, %v424
  %v426 = vpop.f32.mrf.mxu0
  %v427 = vadd.f32 0.0, %v426
  %428 = vmatmul.bf16.gmra.mxu0 %v251
  %v429 = vpop.f32.mrf.mxu0
  %v430 = vadd.f32 0.0, %v429
  %v431 = vpop.f32.mrf.mxu0
  %v432 = vadd.f32 0.0, %v431
  %433 = vmatmul.bf16.gmra.mxu0 %v253
  %v434 = vpop.f32.mrf.mxu0
  %v435 = vadd.f32 0.0, %v434
  %v436 = vpop.f32.mrf.mxu0
  %v437 = vadd.f32 0.0, %v436
  %438 = vmatmul.bf16.gmra.mxu0 %v255
  %v439 = vpop.f32.mrf.mxu0
  %v440 = vadd.f32 0.0, %v439
  %v441 = vpop.f32.mrf.mxu0
  %v442 = vadd.f32 0.0, %v441
  %443 = vmatmul.bf16.gmra.mxu0 %v257
  %v444 = vpop.f32.mrf.mxu0
  %v445 = vadd.f32 0.0, %v444
  %v446 = vpop.f32.mrf.mxu0
  %v447 = vadd.f32 0.0, %v446
  %448 = vmatmul.bf16.gmra.mxu0 %v259
  %v449 = vpop.f32.mrf.mxu0
  %v450 = vadd.f32 0.0, %v449
  %v451 = vpop.f32.mrf.mxu0
  %v452 = vadd.f32 0.0, %v451
  %453 = vmatmul.bf16.gmra.mxu0 %v261
  %v454 = vpop.f32.mrf.mxu0
  %v455 = vadd.f32 0.0, %v454
  %v456 = vpop.f32.mrf.mxu0
  %v457 = vadd.f32 0.0, %v456
  %458 = vmatmul.bf16.gmra.mxu0 %v263
  %v459 = vpop.f32.mrf.mxu0
  %v460 = vadd.f32 0.0, %v459
  %v461 = vpop.f32.mrf.mxu0
  %v462 = vadd.f32 0.0, %v461
  %463 = vmatmul.bf16.gmra.mxu0 %v265
  %v464 = vpop.f32.mrf.mxu0
  %v465 = vadd.f32 0.0, %v464
  %v466 = vpop.f32.mrf.mxu0
  %v467 = vadd.f32 0.0, %v466
  %468 = vmatmul.bf16.gmra.mxu0 %v267
  %v469 = vpop.f32.mrf.mxu0
  %v470 = vadd.f32 0.0, %v469
  %v471 = vpop.f32.mrf.mxu0
  %v472 = vadd.f32 0.0, %v471
  %473 = vmatmul.bf16.gmra.mxu0 %v269
  %v474 = vpop.f32.mrf.mxu0
  %v475 = vadd.f32 0.0, %v474
  %v476 = vpop.f32.mrf.mxu0
  %v477 = vadd.f32 0.0, %v476
  %478 = vmatmul.bf16.gmra.mxu0 %v271
  %v479 = vpop.f32.mrf.mxu0
  %v480 = vadd.f32 0.0, %v479
  %v481 = vpop.f32.mrf.mxu0
  %v482 = vadd.f32 0.0, %v481
  %483 = vmatmul.bf16.gmra.mxu0 %v273
  %v484 = vpop.f32.mrf.mxu0
  %v485 = vadd.f32 0.0, %v484
  %v486 = vpop.f32.mrf.mxu0
  %v487 = vadd.f32 0.0, %v486
  %488 = vmatmul.bf16.gmra.mxu0 %v275
  %v489 = vpop.f32.mrf.mxu0
  %v490 = vadd.f32 0.0, %v489
  %v491 = vpop.f32.mrf.mxu0
  %v492 = vadd.f32 0.0, %v491
  %493 = vdwg.mxu0
  %494 = vmatpush.bf16.msra.mxu0 %v388
  %495 = vmatpush.bf16.msra.mxu0 %v387
  %496 = vmatpush.bf16.msra.mxu0 %v386
  %497 = vmatpush.bf16.msra.mxu0 %v385
  %498 = vmatpush.bf16.msra.mxu0 %v384
  %499 = vmatpush.bf16.msra.mxu0 %v383
  %500 = vmatpush.bf16.msra.mxu0 %v382
  %501 = vmatpush.bf16.msra.mxu0 %v381
  %502 = vmatmul.bf16.gmra.mxu0 %v246
  %v503 = vpop.f32.mrf.mxu0
  %v504 = vadd.f32 %v415, %v503
  %v505 = vpop.f32.mrf.mxu0
  %v506 = vadd.f32 %v417, %v505
  %507 = vmatmul.bf16.gmra.mxu0 %v248
  %v508 = vpop.f32.mrf.mxu0
  %v509 = vadd.f32 %v420, %v508
  %v510 = vpop.f32.mrf.mxu0
  %v511 = vadd.f32 %v422, %v510
  %512 = vmatmul.bf16.gmra.mxu0 %v250
  %v513 = vpop.f32.mrf.mxu0
  %v514 = vadd.f32 %v425, %v513
  %v515 = vpop.f32.mrf.mxu0
  %v516 = vadd.f32 %v427, %v515
  %517 = vmatmul.bf16.gmra.mxu0 %v252
  %v518 = vpop.f32.mrf.mxu0
  %v519 = vadd.f32 %v430, %v518
  %v520 = vpop.f32.mrf.mxu0
  %v521 = vadd.f32 %v432, %v520
  %522 = vmatmul.bf16.gmra.mxu0 %v254
  %v523 = vpop.f32.mrf.mxu0
  %v524 = vadd.f32 %v435, %v523
  %v525 = vpop.f32.mrf.mxu0
  %v526 = vadd.f32 %v437, %v525
  %527 = vmatmul.bf16.gmra.mxu0 %v256
  %v528 = vpop.f32.mrf.mxu0
  %v529 = vadd.f32 %v440, %v528
  %v530 = vpop.f32.mrf.mxu0
  %v531 = vadd.f32 %v442, %v530
  %532 = vmatmul.bf16.gmra.mxu0 %v258
  %v533 = vpop.f32.mrf.mxu0
  %v534 = vadd.f32 %v445, %v533
  %v535 = vpop.f32.mrf.mxu0
  %v536 = vadd.f32 %v447, %v535
  %537 = vmatmul.bf16.gmra.mxu0 %v260
  %v538 = vpop.f32.mrf.mxu0
  %v539 = vadd.f32 %v450, %v538
  %v540 = vpop.f32.mrf.mxu0
  %v541 = vadd.f32 %v452, %v540
  %542 = vmatmul.bf16.gmra.mxu0 %v262
  %v543 = vpop.f32.mrf.mxu0
  %v544 = vadd.f32 %v455, %v543
  %v545 = vpop.f32.mrf.mxu0
  %v546 = vadd.f32 %v457, %v545
  %547 = vmatmul.bf16.gmra.mxu0 %v264
  %v548 = vpop.f32.mrf.mxu0
  %v549 = vadd.f32 %v460, %v548
  %v550 = vpop.f32.mrf.mxu0
  %v551 = vadd.f32 %v462, %v550
  %552 = vmatmul.bf16.gmra.mxu0 %v266
  %v553 = vpop.f32.mrf.mxu0
  %v554 = vadd.f32 %v465, %v553
  %v555 = vpop.f32.mrf.mxu0
  %v556 = vadd.f32 %v467, %v555
  %557 = vmatmul.bf16.gmra.mxu0 %v268
  %v558 = vpop.f32.mrf.mxu0
  %v559 = vadd.f32 %v470, %v558
  %v560 = vpop.f32.mrf.mxu0
  %v561 = vadd.f32 %v472, %v560
  %562 = vmatmul.bf16.gmra.mxu0 %v270
  %v563 = vpop.f32.mrf.mxu0
  %v564 = vadd.f32 %v475, %v563
  %v565 = vpop.f32.mrf.mxu0
  %v566 = vadd.f32 %v477, %v565
  %567 = vmatmul.bf16.gmra.mxu0 %v272
  %v568 = vpop.f32.mrf.mxu0
  %v569 = vadd.f32 %v480, %v568
  %v570 = vpop.f32.mrf.mxu0
  %v571 = vadd.f32 %v482, %v570
  %572 = vmatmul.bf16.gmra.mxu0 %v274
  %v573 = vpop.f32.mrf.mxu0
  %v574 = vadd.f32 %v485, %v573
  %v575 = vpop.f32.mrf.mxu0
  %v576 = vadd.f32 %v487, %v575
  %577 = vmatmul.bf16.gmra.mxu0 %v276
  %v578 = vpop.f32.mrf.mxu0
  %v579 = vadd.f32 %v490, %v578
  %v580 = vpop.f32.mrf.mxu0
  %v581 = vadd.f32 %v492, %v580
  %582 = vdwg.mxu0
  %v583 = vadd.f32 %v53, %v504
  %v584 = vadd.f32 %v54, %v506
  %v585 = vadd.f32 %v55, %v509
  %v586 = vadd.f32 %v56, %v511
  %v587 = vadd.f32 %v57, %v514
  %v588 = vadd.f32 %v58, %v516
  %v589 = vadd.f32 %v59, %v519
  %v590 = vadd.f32 %v60, %v521
  %v591 = vadd.f32 %v61, %v524
  %v592 = vadd.f32 %v62, %v526
  %v593 = vadd.f32 %v63, %v529
  %v594 = vadd.f32 %v64, %v531
  %v595 = vadd.f32 %v65, %v534
  %v596 = vadd.f32 %v66, %v536
  %v597 = vadd.f32 %v67, %v539
  %v598 = vadd.f32 %v68, %v541
  %v599 = vadd.f32 %v69, %v544
  %v600 = vadd.f32 %v70, %v546
  %v601 = vadd.f32 %v71, %v549
  %v602 = vadd.f32 %v72, %v551
  %v603 = vadd.f32 %v73, %v554
  %v604 = vadd.f32 %v74, %v556
  %v605 = vadd.f32 %v75, %v559
  %v606 = vadd.f32 %v76, %v561
  %v607 = vadd.f32 %v77, %v564
  %v608 = vadd.f32 %v78, %v566
  %v609 = vadd.f32 %v79, %v569
  %v610 = vadd.f32 %v80, %v571
  %v611 = vadd.f32 %v81, %v574
  %v612 = vadd.f32 %v82, %v576
  %v613 = vadd.f32 %v83, %v579
  %v614 = vadd.f32 %v84, %v581
  %615 = vst [vmem:[#allocation2] sm:$0xff] %v583
  %616 = vst [vmem:[#allocation2 + $0x8] sm:$0xff] %v584
  %617 = vst [vmem:[#allocation2 + $0x10] sm:$0xff] %v585
  %618 = vst [vmem:[#allocation2 + $0x18] sm:$0xff] %v586
  %619 = vst [vmem:[#allocation2 + $0x20] sm:$0xff] %v587
  %620 = vst [vmem:[#allocation2 + $0x28] sm:$0xff] %v588
  %621 = vst [vmem:[#allocation2 + $0x30] sm:$0xff] %v589
  %622 = vst [vmem:[#allocation2 + $0x38] sm:$0xff] %v590
  %623 = vst [vmem:[#allocation2 + $0x40] sm:$0xff] %v591
  %624 = vst [vmem:[#allocation2 + $0x48] sm:$0xff] %v592
  %625 = vst [vmem:[#allocation2 + $0x50] sm:$0xff] %v593
  %626 = vst [vmem:[#allocation2 + $0x58] sm:$0xff] %v594
  %627 = vst [vmem:[#allocation2 + $0x60] sm:$0xff] %v595
  %628 = vst [vmem:[#allocation2 + $0x68] sm:$0xff] %v596
  %629 = vst [vmem:[#allocation2 + $0x70] sm:$0xff] %v597
  %630 = vst [vmem:[#allocation2 + $0x78] sm:$0xff] %v598
  %631 = vst [vmem:[#allocation2 + $0x80] sm:$0xff] %v599
  %632 = vst [vmem:[#allocation2 + $0x88] sm:$0xff] %v600
  %633 = vst [vmem:[#allocation2 + $0x90] sm:$0xff] %v601
  %634 = vst [vmem:[#allocation2 + $0x98] sm:$0xff] %v602
  %635 = vst [vmem:[#allocation2 + $0xa0] sm:$0xff] %v603
  %636 = vst [vmem:[#allocation2 + $0xa8] sm:$0xff] %v604
  %637 = vst [vmem:[#allocation2 + $0xb0] sm:$0xff] %v605
  %638 = vst [vmem:[#allocation2 + $0xb8] sm:$0xff] %v606
  %639 = vst [vmem:[#allocation2 + $0xc0] sm:$0xff] %v607
  %640 = vst [vmem:[#allocation2 + $0xc8] sm:$0xff] %v608
  %641 = vst [vmem:[#allocation2 + $0xd0] sm:$0xff] %v609
  %642 = vst [vmem:[#allocation2 + $0xd8] sm:$0xff] %v610
  %643 = vst [vmem:[#allocation2 + $0xe0] sm:$0xff] %v611
  %644 = vst [vmem:[#allocation2 + $0xe8] sm:$0xff] %v612
  %645 = vst [vmem:[#allocation2 + $0xf0] sm:$0xff] %v613
  %646 = vst [vmem:[#allocation2 + $0xf8] sm:$0xff] %v614
  // Predicated region
  $region22: #{net_forward.4} parent=0 // pred_check
    %p647 = pneg %p17
  $region23: #{net_forward.4} parent=0 // pred_check_branch
    %649 = sbr.rel (%p647) target = $region25
  $region24: #{net_forward.4} parent=0 // pred_region
    %v650 = vld [vmem:[#allocation2] sm:$0xff]
    %v651 = vld [vmem:[#allocation2 + $0x8] sm:$0xff]
    %v652 = vld [vmem:[#allocation2 + $0x10] sm:$0xff]
    %v653 = vld [vmem:[#allocation2 + $0x18] sm:$0xff]
    %v654 = vld [vmem:[#allocation2 + $0x20] sm:$0xff]
    %v655 = vld [vmem:[#allocation2 + $0x28] sm:$0xff]
    %v656 = vld [vmem:[#allocation2 + $0x30] sm:$0xff]
    %v657 = vld [vmem:[#allocation2 + $0x38] sm:$0xff]
    %v658 = vld [vmem:[#allocation2 + $0x40] sm:$0xff]
    %v659 = vld [vmem:[#allocation2 + $0x48] sm:$0xff]
    %v660 = vld [vmem:[#allocation2 + $0x50] sm:$0xff]
    %v661 = vld [vmem:[#allocation2 + $0x58] sm:$0xff]
    %v662 = vld [vmem:[#allocation2 + $0x60] sm:$0xff]
    %v663 = vld [vmem:[#allocation2 + $0x68] sm:$0xff]
    %v664 = vld [vmem:[#allocation2 + $0x70] sm:$0xff]
    %v665 = vld [vmem:[#allocation2 + $0x78] sm:$0xff]
    %v666 = vld [vmem:[#allocation2 + $0x80] sm:$0xff]
    %v667 = vld [vmem:[#allocation2 + $0x88] sm:$0xff]
    %v668 = vld [vmem:[#allocation2 + $0x90] sm:$0xff]
    %v669 = vld [vmem:[#allocation2 + $0x98] sm:$0xff]
    %v670 = vld [vmem:[#allocation2 + $0xa0] sm:$0xff]
    %v671 = vld [vmem:[#allocation2 + $0xa8] sm:$0xff]
    %v672 = vld [vmem:[#allocation2 + $0xb0] sm:$0xff]
    %v673 = vld [vmem:[#allocation2 + $0xb8] sm:$0xff]
    %v674 = vld [vmem:[#allocation2 + $0xc0] sm:$0xff]
    %v675 = vld [vmem:[#allocation2 + $0xc8] sm:$0xff]
    %v676 = vld [vmem:[#allocation2 + $0xd0] sm:$0xff]
    %v677 = vld [vmem:[#allocation2 + $0xd8] sm:$0xff]
    %v678 = vld [vmem:[#allocation2 + $0xe0] sm:$0xff]
    %v679 = vld [vmem:[#allocation2 + $0xe8] sm:$0xff]
    %v680 = vld [vmem:[#allocation2 + $0xf0] sm:$0xff]
    %v681 = vld [vmem:[#allocation2 + $0xf8] sm:$0xff]
    %v682 = vld [vmem:[%s2] sm:$0x1]
    %v684 = vperm.slane %v682, 0
    %v686 = vadd.f32 %v650, %v684
    %v687 = vadd.f32 %v651, %v684
    %v688 = vadd.f32 %v652, %v684
    %v689 = vadd.f32 %v653, %v684
    %v690 = vadd.f32 %v654, %v684
    %v691 = vadd.f32 %v655, %v684
    %v692 = vadd.f32 %v656, %v684
    %v693 = vadd.f32 %v657, %v684
    %v694 = vadd.f32 %v658, %v684
    %v695 = vadd.f32 %v659, %v684
    %v696 = vadd.f32 %v660, %v684
    %v697 = vadd.f32 %v661, %v684
    %v698 = vadd.f32 %v662, %v684
    %v699 = vadd.f32 %v663, %v684
    %v700 = vadd.f32 %v664, %v684
    %v701 = vadd.f32 %v665, %v684
    %v702 = vadd.f32 %v666, %v684
    %v703 = vadd.f32 %v667, %v684
    %v704 = vadd.f32 %v668, %v684
    %v705 = vadd.f32 %v669, %v684
    %v706 = vadd.f32 %v670, %v684
    %v707 = vadd.f32 %v671, %v684
    %v708 = vadd.f32 %v672, %v684
    %v709 = vadd.f32 %v673, %v684
    %v710 = vadd.f32 %v674, %v684
    %v711 = vadd.f32 %v675, %v684
    %v712 = vadd.f32 %v676, %v684
    %v713 = vadd.f32 %v677, %v684
    %v714 = vadd.f32 %v678, %v684
    %v715 = vadd.f32 %v679, %v684
    %v716 = vadd.f32 %v680, %v684
    %v717 = vadd.f32 %v681, %v684
    %v718 = vmax.f32 %v686, 0.0
    %v719 = vmax.f32 %v687, 0.0
    %v720 = vmax.f32 %v688, 0.0
    %v721 = vmax.f32 %v689, 0.0
    %v722 = vmax.f32 %v690, 0.0
    %v723 = vmax.f32 %v691, 0.0
    %v724 = vmax.f32 %v692, 0.0
    %v725 = vmax.f32 %v693, 0.0
    %v726 = vmax.f32 %v694, 0.0
    %v727 = vmax.f32 %v695, 0.0
    %v728 = vmax.f32 %v696, 0.0
    %v729 = vmax.f32 %v697, 0.0
    %v730 = vmax.f32 %v698, 0.0
    %v731 = vmax.f32 %v699, 0.0
    %v732 = vmax.f32 %v700, 0.0
    %v733 = vmax.f32 %v701, 0.0
    %v734 = vmax.f32 %v702, 0.0
    %v735 = vmax.f32 %v703, 0.0
    %v736 = vmax.f32 %v704, 0.0
    %v737 = vmax.f32 %v705, 0.0
    %v738 = vmax.f32 %v706, 0.0
    %v739 = vmax.f32 %v707, 0.0
    %v740 = vmax.f32 %v708, 0.0
    %v741 = vmax.f32 %v709, 0.0
    %v742 = vmax.f32 %v710, 0.0
    %v743 = vmax.f32 %v711, 0.0
    %v744 = vmax.f32 %v712, 0.0
    %v745 = vmax.f32 %v713, 0.0
    %v746 = vmax.f32 %v714, 0.0
    %v747 = vmax.f32 %v715, 0.0
    %v748 = vmax.f32 %v716, 0.0
    %v749 = vmax.f32 %v717, 0.0
    %v750 = vld [vmem:[%s3] sm:$0x1]
    %v752 = vperm.slane %v750, 0
    %v754 = vmul.f32 %v718, %v752
    %v755 = vmul.f32 %v719, %v752
    %v756 = vmul.f32 %v720, %v752
    %v757 = vmul.f32 %v721, %v752
    %v758 = vmul.f32 %v722, %v752
    %v759 = vmul.f32 %v723, %v752
    %v760 = vmul.f32 %v724, %v752
    %v761 = vmul.f32 %v725, %v752
    %v762 = vmul.f32 %v726, %v752
    %v763 = vmul.f32 %v727, %v752
    %v764 = vmul.f32 %v728, %v752
    %v765 = vmul.f32 %v729, %v752
    %v766 = vmul.f32 %v730, %v752
    %v767 = vmul.f32 %v731, %v752
    %v768 = vmul.f32 %v732, %v752
    %v769 = vmul.f32 %v733, %v752
    %v770 = vmul.f32 %v734, %v752
    %v771 = vmul.f32 %v735, %v752
    %v772 = vmul.f32 %v736, %v752
    %v773 = vmul.f32 %v737, %v752
    %v774 = vmul.f32 %v738, %v752
    %v775 = vmul.f32 %v739, %v752
    %v776 = vmul.f32 %v740, %v752
    %v777 = vmul.f32 %v741, %v752
    %v778 = vmul.f32 %v742, %v752
    %v779 = vmul.f32 %v743, %v752
    %v780 = vmul.f32 %v744, %v752
    %v781 = vmul.f32 %v745, %v752
    %v782 = vmul.f32 %v746, %v752
    %v783 = vmul.f32 %v747, %v752
    %v784 = vmul.f32 %v748, %v752
    %v785 = vmul.f32 %v749, %v752
    %786 = vadd.xlane.f32.xlu0 %v754
    %v787 = vpop.xlane.xlu0 %786
    %788 = vadd.xlane.f32.xlu0 %v755
    %v789 = vpop.xlane.xlu0 %788
    %790 = vadd.xlane.f32.xlu0 %v756
    %v791 = vpop.xlane.xlu0 %790
    %792 = vadd.xlane.f32.xlu0 %v757
    %v793 = vpop.xlane.xlu0 %792
    %794 = vadd.xlane.f32.xlu0 %v758
    %v795 = vpop.xlane.xlu0 %794
    %796 = vadd.xlane.f32.xlu0 %v759
    %v797 = vpop.xlane.xlu0 %796
    %798 = vadd.xlane.f32.xlu0 %v760
    %v799 = vpop.xlane.xlu0 %798
    %800 = vadd.xlane.f32.xlu0 %v761
    %v801 = vpop.xlane.xlu0 %800
    %802 = vadd.xlane.f32.xlu0 %v762
    %v803 = vpop.xlane.xlu0 %802
    %804 = vadd.xlane.f32.xlu0 %v763
    %v805 = vpop.xlane.xlu0 %804
    %806 = vadd.xlane.f32.xlu0 %v764
    %v807 = vpop.xlane.xlu0 %806
    %808 = vadd.xlane.f32.xlu0 %v765
    %v809 = vpop.xlane.xlu0 %808
    %810 = vadd.xlane.f32.xlu0 %v766
    %v811 = vpop.xlane.xlu0 %810
    %812 = vadd.xlane.f32.xlu0 %v767
    %v813 = vpop.xlane.xlu0 %812
    %814 = vadd.xlane.f32.xlu0 %v768
    %v815 = vpop.xlane.xlu0 %814
    %816 = vadd.xlane.f32.xlu0 %v769
    %v817 = vpop.xlane.xlu0 %816
    %818 = vadd.xlane.f32.xlu0 %v770
    %v819 = vpop.xlane.xlu0 %818
    %820 = vadd.xlane.f32.xlu0 %v771
    %v821 = vpop.xlane.xlu0 %820
    %822 = vadd.xlane.f32.xlu0 %v772
    %v823 = vpop.xlane.xlu0 %822
    %824 = vadd.xlane.f32.xlu0 %v773
    %v825 = vpop.xlane.xlu0 %824
    %826 = vadd.xlane.f32.xlu0 %v774
    %v827 = vpop.xlane.xlu0 %826
    %828 = vadd.xlane.f32.xlu0 %v775
    %v829 = vpop.xlane.xlu0 %828
    %830 = vadd.xlane.f32.xlu0 %v776
    %v831 = vpop.xlane.xlu0 %830
    %832 = vadd.xlane.f32.xlu0 %v777
    %v833 = vpop.xlane.xlu0 %832
    %834 = vadd.xlane.f32.xlu0 %v778
    %v835 = vpop.xlane.xlu0 %834
    %836 = vadd.xlane.f32.xlu0 %v779
    %v837 = vpop.xlane.xlu0 %836
    %838 = vadd.xlane.f32.xlu0 %v780
    %v839 = vpop.xlane.xlu0 %838
    %840 = vadd.xlane.f32.xlu0 %v781
    %v841 = vpop.xlane.xlu0 %840
    %842 = vadd.xlane.f32.xlu0 %v782
    %v843 = vpop.xlane.xlu0 %842
    %844 = vadd.xlane.f32.xlu0 %v783
    %v845 = vpop.xlane.xlu0 %844
    %846 = vadd.xlane.f32.xlu0 %v784
    %v847 = vpop.xlane.xlu0 %846
    %848 = vadd.xlane.f32.xlu0 %v785
    %v849 = vpop.xlane.xlu0 %848
    %850 = vst [vmem:[%s4] sm:$0xff] %v787
    %851 = vst [vmem:[%s4 + $0x8] sm:$0xff] %v789
    %852 = vst [vmem:[%s4 + $0x10] sm:$0xff] %v791
    %853 = vst [vmem:[%s4 + $0x18] sm:$0xff] %v793
    %854 = vst [vmem:[%s4 + $0x20] sm:$0xff] %v795
    %855 = vst [vmem:[%s4 + $0x28] sm:$0xff] %v797
    %856 = vst [vmem:[%s4 + $0x30] sm:$0xff] %v799
    %857 = vst [vmem:[%s4 + $0x38] sm:$0xff] %v801
    %858 = vst [vmem:[%s4 + $0x40] sm:$0xff] %v803
    %859 = vst [vmem:[%s4 + $0x48] sm:$0xff] %v805
    %860 = vst [vmem:[%s4 + $0x50] sm:$0xff] %v807
    %861 = vst [vmem:[%s4 + $0x58] sm:$0xff] %v809
    %862 = vst [vmem:[%s4 + $0x60] sm:$0xff] %v811
    %863 = vst [vmem:[%s4 + $0x68] sm:$0xff] %v813
    %864 = vst [vmem:[%s4 + $0x70] sm:$0xff] %v815
    %865 = vst [vmem:[%s4 + $0x78] sm:$0xff] %v817
    %866 = vst [vmem:[%s4 + $0x80] sm:$0xff] %v819
    %867 = vst [vmem:[%s4 + $0x88] sm:$0xff] %v821
    %868 = vst [vmem:[%s4 + $0x90] sm:$0xff] %v823
    %869 = vst [vmem:[%s4 + $0x98] sm:$0xff] %v825
    %870 = vst [vmem:[%s4 + $0xa0] sm:$0xff] %v827
    %871 = vst [vmem:[%s4 + $0xa8] sm:$0xff] %v829
    %872 = vst [vmem:[%s4 + $0xb0] sm:$0xff] %v831
    %873 = vst [vmem:[%s4 + $0xb8] sm:$0xff] %v833
    %874 = vst [vmem:[%s4 + $0xc0] sm:$0xff] %v835
    %875 = vst [vmem:[%s4 + $0xc8] sm:$0xff] %v837
    %876 = vst [vmem:[%s4 + $0xd0] sm:$0xff] %v839
    %877 = vst [vmem:[%s4 + $0xd8] sm:$0xff] %v841
    %878 = vst [vmem:[%s4 + $0xe0] sm:$0xff] %v843
    %879 = vst [vmem:[%s4 + $0xe8] sm:$0xff] %v845
    %880 = vst [vmem:[%s4 + $0xf0] sm:$0xff] %v847
    %881 = vst [vmem:[%s4 + $0xf8] sm:$0xff] %v849
  $region25: #{net_forward.4} parent=0 // pred_fallthru
    _
  // Predicated region
  $region26: #{net_forward.4} parent=0 // pred_check
    _
  $region27: #{net_forward.4} parent=0 // pred_check_branch
    %883 = sbr.rel (0) target = $region29
  $region28: #{net_forward.4} parent=0 // pred_region
    _
  $region29: #{net_forward.4} parent=0 // pred_fallthru
    _
  // Predicated region
  $region30: #{net_forward.4} parent=0 // pred_check
    _
  $region31: #{net_forward.4} parent=0 // pred_check_branch
    %885 = sbr.rel (0) target = $region33
  $region32: #{net_forward.4} parent=0 // pred_region
    _
  $region33: #{net_forward.4} parent=0 // pred_fallthru
    _

</llo_original>
